<compile_context>
chip_gen: v6e
topology: v6e:2x2x1
jax: 0.10.0
libtpu: 0.0.40
codegen_flags: <defaults>
</compile_context>

<pallas_src>
import jax
import jax.numpy as jnp
from jax.experimental import pallas as pl
from jax.experimental.pallas import tpu as pltpu


def stock_lstm_kernel(x_ref, wih0b_ref, wbig_ref, biasb_ref, wfc_ref, bfc_ref,
                      out_ref, proj_ref):
    """x_ref: (T*B, I) time-major flattened input for this batch block.

    Gate columns of the 8H-wide fused weights are interleaved
    [i0 i1 | f0 f1 | g0 g1 | o0 o1]; the g block is pre-scaled by 2 so a
    single sigmoid pass plus a 2*s-1 fixup yields both sigmoid and tanh gates.
    """
    B = out_ref.shape[0]
    T = x_ref.shape[0] // B
    H2 = wbig_ref.shape[0]          # 2H (combined [layer0 | layer1] width)
    H = H2 // 2

    # Hoisted layer-0 input projection for ALL timesteps: one big MXU matmul
    # (M = T*B), completely off the serial critical path.  Layer-1 columns of
    # wih0b are zero, so every row's layer-1 columns equal b1.
    proj_ref[...] = (jnp.dot(x_ref[...], wih0b_ref[...],
                             preferred_element_type=jnp.float32)
                     + biasb_ref[...])

    w_big = wbig_ref[...]           # (2H, 8H) fused recurrent weight

    def gate_update(gates, c):
        # ONE sigmoid pass over the whole (B, 8H) tile; tanh gates recovered
        # with a VPU fma thanks to the pre-scaled g columns.
        s = jax.nn.sigmoid(gates)
        i = s[:, 0 * H2:1 * H2]
        f = s[:, 1 * H2:2 * H2]
        g = 2.0 * s[:, 2 * H2:3 * H2] - 1.0
        o = s[:, 3 * H2:4 * H2]
        c_new = f * c + i * g
        h_new = o * jnp.tanh(c_new)
        return h_new, c_new

    # ---- prologue: layer-0 @ t=0 (all states start at zero, so the fused
    # recurrent matmul vanishes and the gates are just proj[0]).
    zeros2 = jnp.zeros((B, H2), jnp.float32)
    h, c = gate_update(proj_ref[0:B, :], zeros2)
    # keep only the layer-0 half; layer-1 state must enter the loop as zero.
    lane = jax.lax.broadcasted_iota(jnp.int32, (B, H2), 1)
    layer0 = lane < H
    h = jnp.where(layer0, h, 0.0)
    c = jnp.where(layer0, c, 0.0)

    # ---- skewed recurrence.  State entering iteration t:
    #   h = [h0_t | h1_{t-1}],  c = [c0_t | c1_{t-1}]
    # One fused matmul produces layer-1 gates @ t (odd gate columns) and
    # layer-0 recurrent gates @ t+1 (even gate columns); a single combined
    # (B, 2H) cell update advances both layers, and the resulting h tile
    # [h0_{t+1} | h1_t] is exactly the next iteration's matmul input.
    # T is static and small, so the loop is fully unrolled.
    for t in range(T):
        # On the last iteration only the layer-1 columns of the addend matter
        # (they equal b1 in every row); the layer-0 half of that update is
        # never read, so reusing row block T-1 is safe.
        idx = min(t + 1, T - 1)
        gates = (jnp.dot(h, w_big, preferred_element_type=jnp.float32)
                 + proj_ref[idx * B:(idx + 1) * B, :])
        h, c = gate_update(gates, c)

    # h[:, H:2H] == h1_{T-1}: top-layer hidden state at the last timestep.
    # fc = VPU multiply + lane reduction (an (H,1) MXU matmul would waste a push).
    h1 = h[:, H:2 * H]
    out_ref[...] = (jnp.sum(h1 * wfc_ref[...], axis=-1, keepdims=True)
                    + bfc_ref[...])


def _pack_fused_weights(params):
    """Build the fused, gate-interleaved, g-scaled weights (wrapper-side, once)."""
    H = params["whh0"].shape[0]
    H8 = 8 * H

    def place(layer, block_4h):
        # scatter a (rows, 4H) [i|f|g|o] block into the interleaved (rows, 8H)
        # layout [i0 i1 | f0 f1 | g0 g1 | o0 o1]; `layer` picks the 0/1 slot.
        rows = block_4h.shape[0]
        out = jnp.zeros((rows, H8), jnp.float32)
        for gate in range(4):
            col = (2 * gate + layer) * H
            out = out.at[:, col:col + H].set(
                block_4h[:, gate * H:(gate + 1) * H])
        return out

    # pre-scale the g-gate columns by 2 so tanh(z) = 2*sigmoid(2z) - 1.
    gscale = jnp.ones((1, H8), jnp.float32).at[:, 4 * H:6 * H].set(2.0)

    wih0_big = place(0, params["wih0"]) * gscale                       # (I, 8H)
    bias_big = (place(0, params["b0"]) + place(1, params["b1"])) * gscale
    # rows 0:H multiply h0 (-> whh0 for layer-0 gates, wih1 for layer-1 gates),
    # rows H:2H multiply h1 (-> whh1 for layer-1 gates, zero for layer-0).
    w_big = jnp.concatenate(
        [place(0, params["whh0"]) + place(1, params["wih1"]),
         place(1, params["whh1"])], axis=0) * gscale                    # (2H, 8H)
    return wih0_big, w_big, bias_big


def stock_lstm_forward(x, params, *, batch_block=None):
    """x: (B, T, I) batch_first (PyTorch convention). Returns (B, 1)."""
    B, T, I = x.shape
    H = params["whh0"].shape[0]
    H8 = 8 * H

    # Pad batch to a sublane multiple and tile it over a parallel grid axis
    # (shards across the two TensorCores on v7x once the batch is large).
    if batch_block is None:
        batch_block = min(max(8, -(-B // 8) * 8), 128)
    B_pad = -(-B // batch_block) * batch_block
    nb = B_pad // batch_block

    x_p = jnp.pad(x.astype(jnp.float32), ((0, B_pad - B), (0, 0), (0, 0)))
    # Reorder so each batch block is a contiguous, time-major (T*blk, I) slab:
    # (B_pad, T, I) -> (T, nb, blk, I) -> (nb, T, blk, I) -> (nb*T*blk, I)
    x_tm = jnp.transpose(x_p, (1, 0, 2)).reshape(T, nb, batch_block, I)
    x_tm = jnp.transpose(x_tm, (1, 0, 2, 3)).reshape(nb * T * batch_block, I)

    wih0_big, w_big, bias_big = _pack_fused_weights(params)

    out = pl.pallas_call(
        stock_lstm_kernel,
        out_shape=jax.ShapeDtypeStruct((B_pad, 1), jnp.float32),
        grid=(nb,),
        in_specs=[
            pl.BlockSpec((T * batch_block, I), lambda b: (b, 0)),
            pl.BlockSpec(wih0_big.shape, lambda b: (0, 0)),
            pl.BlockSpec(w_big.shape, lambda b: (0, 0)),
            pl.BlockSpec(bias_big.shape, lambda b: (0, 0)),
            pl.BlockSpec(params["wfc"].shape, lambda b: (0, 0)),
            pl.BlockSpec(params["bfc"].shape, lambda b: (0, 0)),
        ],
        out_specs=pl.BlockSpec((batch_block, 1), lambda b: (b, 0)),
        scratch_shapes=[pltpu.VMEM((T * batch_block, H8), jnp.float32)],
        compiler_params=pltpu.CompilerParams(
            dimension_semantics=("parallel",)),
    )(x_tm, wih0_big, w_big, bias_big, params["wfc"], params["bfc"])
    return out[:B]


def init_params(key, input_size, hidden_size):
    """Deterministic init mirroring nn.LSTM / nn.Linear parameter shapes.

    PyTorch stores weight_ih_l{k}: (4H, in), weight_hh_l{k}: (4H, H),
    bias_ih/bias_hh: (4H,), fc.weight: (1, H).  LSTM weights are kept
    pre-transposed; the two LSTM biases are folded (their sum is what the
    forward pass uses).
    """
    H = hidden_size
    k = 1.0 / jnp.sqrt(jnp.float32(H))
    keys = jax.random.split(key, 10)

    def u(kk, shape):
        return jax.random.uniform(kk, shape, jnp.float32, minval=-k, maxval=k)

    return {
        "wih0": u(keys[0], (input_size, 4 * H)),                 # weight_ih_l0.T
        "whh0": u(keys[1], (H, 4 * H)),                          # weight_hh_l0.T
        "b0": u(keys[2], (1, 4 * H)) + u(keys[3], (1, 4 * H)),   # bias_ih + bias_hh
        "wih1": u(keys[4], (H, 4 * H)),                          # weight_ih_l1.T
        "whh1": u(keys[5], (H, 4 * H)),                          # weight_hh_l1.T
        "b1": u(keys[6], (1, 4 * H)) + u(keys[7], (1, 4 * H)),
        "wfc": u(keys[8], (1, H)),                               # fc.weight
        "bfc": u(keys[9], (1, 1)),                               # fc.bias
    }


def reference_forward(x, params):
    """Pure-JAX reference of the same forward pass (for verification)."""
    B, T, I = x.shape
    H = params["whh0"].shape[0]

    def cell(x_t, h, c, wih, whh, b):
        g = x_t @ wih + h @ whh + b
        i = jax.nn.sigmoid(g[:, 0 * H:1 * H])
        f = jax.nn.sigmoid(g[:, 1 * H:2 * H])
        gg = jnp.tanh(g[:, 2 * H:3 * H])
        o = jax.nn.sigmoid(g[:, 3 * H:4 * H])
        c_new = f * c + i * gg
        return o * jnp.tanh(c_new), c_new

    h0 = c0 = h1 = c1 = jnp.zeros((B, H), jnp.float32)
    for t in range(T):
        x_t = x[:, t, :]
        h0, c0 = cell(x_t, h0, c0, params["wih0"], params["whh0"], params["b0"])
        h1, c1 = cell(h0, h1, c1, params["wih1"], params["whh1"], params["b1"])
    return h1 @ params["wfc"].T + params["bfc"]


if __name__ == "__main__":
    B, T, I, H = 4, 8, 8, 32

    key = jax.random.PRNGKey(0)
    kx, kp = jax.random.split(key)
    x = jax.random.normal(kx, (B, T, I), jnp.float32)
    params = init_params(kp, I, H)

    out = stock_lstm_forward(x, params)
    out = jax.block_until_ready(out)

    ref = reference_forward(x, params)
    assert out.shape == (B, 1)
    assert jnp.allclose(out, ref, atol=1e-4, rtol=1e-4), (out, ref)

    print("KERNEL_OK")
</pallas_src>

<mosaic_0001>
module attributes {stable_mosaic.version = 11 : i64} {
  func.func @stock_lstm_kernel(%arg0: i32, %arg1: memref<64x8xf32, #tpu.memory_space<vmem>>, %arg2: memref<8x256xf32, #tpu.memory_space<vmem>>, %arg3: memref<64x256xf32, #tpu.memory_space<vmem>>, %arg4: memref<1x256xf32, #tpu.memory_space<vmem>>, %arg5: memref<1x32xf32, #tpu.memory_space<vmem>>, %arg6: memref<1x1xf32, #tpu.memory_space<vmem>>, %arg7: memref<8x1xf32, #tpu.memory_space<vmem>>, %arg8: memref<64x256xf32, #tpu.memory_space<vmem>>) attributes {dimension_semantics = [#tpu.dimension_semantics<parallel>], iteration_bounds = array<i64: 1>, scalar_prefetch = 0 : i64, scratch_operands = 1 : i64, tpu.core_type = #tpu.core_type<tc>, window_params = [{transform_indices = @transform_0, window_bounds = array<i64: 64, 8>}, {pipeline_mode = #tpu.pipeline_mode<synchronous>, transform_indices = @transform_1, window_bounds = array<i64: 8, 256>}, {pipeline_mode = #tpu.pipeline_mode<synchronous>, transform_indices = @transform_2, window_bounds = array<i64: 64, 256>}, {pipeline_mode = #tpu.pipeline_mode<synchronous>, transform_indices = @transform_3, window_bounds = array<i64: 1, 256>}, {pipeline_mode = #tpu.pipeline_mode<synchronous>, transform_indices = @transform_4, window_bounds = array<i64: 1, 32>}, {pipeline_mode = #tpu.pipeline_mode<synchronous>, transform_indices = @transform_5, window_bounds = array<i64: 1, 1>}, {transform_indices = @transform_6, window_bounds = array<i64: 8, 1>}]} {
    %c0 = arith.constant 0 : index
    %c0_0 = arith.constant 0 : index
    %0 = vector.load %arg1[%c0, %c0_0] : memref<64x8xf32, #tpu.memory_space<vmem>>, vector<64x8xf32>
    %c0_1 = arith.constant 0 : index
    %c0_2 = arith.constant 0 : index
    %1 = vector.load %arg2[%c0_1, %c0_2] : memref<8x256xf32, #tpu.memory_space<vmem>>, vector<8x256xf32>
    %cst = arith.constant dense<0.000000e+00> : vector<64x256xf32>
    %2 = tpu.matmul %0, %1, %cst {dimension_numbers = #tpu.dot_dimension_numbers<[1], [0], [0], [1], [0, 0, 1, 1], [], []>} : vector<64x8xf32>, vector<8x256xf32>, vector<64x256xf32> -> vector<64x256xf32>
    %c0_3 = arith.constant 0 : index
    %c0_4 = arith.constant 0 : index
    %3 = vector.load %arg4[%c0_3, %c0_4] : memref<1x256xf32, #tpu.memory_space<vmem>>, vector<1x256xf32>
    %4 = vector.broadcast %3 : vector<1x256xf32> to vector<64x256xf32>
    %5 = arith.addf %2, %4 : vector<64x256xf32>
    %c0_5 = arith.constant 0 : index
    %c0_6 = arith.constant 0 : index
    %6 = vector.load %arg8[%c0_5, %c0_6] : memref<64x256xf32, #tpu.memory_space<vmem>>, vector<64x256xf32>
    tpu.vector_store %arg8[%c0_5, %c0_6], %5 {strides = array<i32>} : memref<64x256xf32, #tpu.memory_space<vmem>>, vector<64x256xf32>,
    %c0_7 = arith.constant 0 : index
    %c0_8 = arith.constant 0 : index
    %7 = vector.load %arg3[%c0_7, %c0_8] : memref<64x256xf32, #tpu.memory_space<vmem>>, vector<64x256xf32>
    %cst_9 = arith.constant 0.000000e+00 : f32
    %8 = vector.broadcast %cst_9 : f32 to vector<8x64xf32>
    %c0_10 = arith.constant 0 : index
    %c0_11 = arith.constant 0 : index
    %9 = vector.load %arg8[%c0_10, %c0_11] : memref<64x256xf32, #tpu.memory_space<vmem>>, vector<8x256xf32>
    %10 = arith.negf %9 : vector<8x256xf32>
    %11 = math.exp %10 : vector<8x256xf32>
    %cst_12 = arith.constant 1.000000e+00 : f32
    %12 = vector.broadcast %cst_12 : f32 to vector<8x256xf32>
    %13 = arith.addf %12, %11 : vector<8x256xf32>
    %14 = arith.divf %12, %13 : vector<8x256xf32>
    %15 = vector.extract_strided_slice %14 {offsets = [0, 0], sizes = [8, 64], strides = [1, 1]} : vector<8x256xf32> to vector<8x64xf32>
    %16 = vector.extract_strided_slice %14 {offsets = [0, 64], sizes = [8, 64], strides = [1, 1]} : vector<8x256xf32> to vector<8x64xf32>
    %17 = vector.extract_strided_slice %14 {offsets = [0, 128], sizes = [8, 64], strides = [1, 1]} : vector<8x256xf32> to vector<8x64xf32>
    %cst_13 = arith.constant 2.000000e+00 : f32
    %18 = vector.broadcast %cst_13 : f32 to vector<8x64xf32>
    %19 = arith.mulf %18, %17 : vector<8x64xf32>
    %cst_14 = arith.constant 1.000000e+00 : f32
    %20 = vector.broadcast %cst_14 : f32 to vector<8x64xf32>
    %21 = arith.subf %19, %20 : vector<8x64xf32>
    %22 = vector.extract_strided_slice %14 {offsets = [0, 192], sizes = [8, 64], strides = [1, 1]} : vector<8x256xf32> to vector<8x64xf32>
    %23 = arith.mulf %16, %8 : vector<8x64xf32>
    %24 = arith.mulf %15, %21 : vector<8x64xf32>
    %25 = arith.addf %23, %24 : vector<8x64xf32>
    %26 = math.tanh %25 : vector<8x64xf32>
    %27 = arith.mulf %22, %26 : vector<8x64xf32>
    %28 = tpu.iota {dimensions = array<i32: 1>} : vector<8x64xi32>
    %c32_i32 = arith.constant 32 : i32
    %29 = vector.broadcast %c32_i32 : i32 to vector<8x64xi32>
    %30 = arith.cmpi slt, %28, %29 : vector<8x64xi32>
    %cst_15 = arith.constant 0.000000e+00 : f32
    %31 = vector.broadcast %cst_15 : f32 to vector<8x64xf32>
    %32 = arith.select %30, %27, %31 : vector<8x64xi1>, vector<8x64xf32>
    %cst_16 = arith.constant 0.000000e+00 : f32
    %33 = vector.broadcast %cst_16 : f32 to vector<8x64xf32>
    %34 = arith.select %30, %25, %33 : vector<8x64xi1>, vector<8x64xf32>
    %cst_17 = arith.constant dense<0.000000e+00> : vector<8x256xf32>
    %35 = tpu.matmul %32, %7, %cst_17 {dimension_numbers = #tpu.dot_dimension_numbers<[1], [0], [0], [1], [0, 0, 1, 1], [], []>} : vector<8x64xf32>, vector<64x256xf32>, vector<8x256xf32> -> vector<8x256xf32>
    %c8 = arith.constant 8 : index
    %c0_18 = arith.constant 0 : index
    %36 = vector.load %arg8[%c8, %c0_18] : memref<64x256xf32, #tpu.memory_space<vmem>>, vector<8x256xf32>
    %37 = arith.addf %35, %36 : vector<8x256xf32>
    %38 = arith.negf %37 : vector<8x256xf32>
    %39 = math.exp %38 : vector<8x256xf32>
    %cst_19 = arith.constant 1.000000e+00 : f32
    %40 = vector.broadcast %cst_19 : f32 to vector<8x256xf32>
    %41 = arith.addf %40, %39 : vector<8x256xf32>
    %42 = arith.divf %40, %41 : vector<8x256xf32>
    %43 = vector.extract_strided_slice %42 {offsets = [0, 0], sizes = [8, 64], strides = [1, 1]} : vector<8x256xf32> to vector<8x64xf32>
    %44 = vector.extract_strided_slice %42 {offsets = [0, 64], sizes = [8, 64], strides = [1, 1]} : vector<8x256xf32> to vector<8x64xf32>
    %45 = vector.extract_strided_slice %42 {offsets = [0, 128], sizes = [8, 64], strides = [1, 1]} : vector<8x256xf32> to vector<8x64xf32>
    %cst_20 = arith.constant 2.000000e+00 : f32
    %46 = vector.broadcast %cst_20 : f32 to vector<8x64xf32>
    %47 = arith.mulf %46, %45 : vector<8x64xf32>
    %cst_21 = arith.constant 1.000000e+00 : f32
    %48 = vector.broadcast %cst_21 : f32 to vector<8x64xf32>
    %49 = arith.subf %47, %48 : vector<8x64xf32>
    %50 = vector.extract_strided_slice %42 {offsets = [0, 192], sizes = [8, 64], strides = [1, 1]} : vector<8x256xf32> to vector<8x64xf32>
    %51 = arith.mulf %44, %34 : vector<8x64xf32>
    %52 = arith.mulf %43, %49 : vector<8x64xf32>
    %53 = arith.addf %51, %52 : vector<8x64xf32>
    %54 = math.tanh %53 : vector<8x64xf32>
    %55 = arith.mulf %50, %54 : vector<8x64xf32>
    %cst_22 = arith.constant dense<0.000000e+00> : vector<8x256xf32>
    %56 = tpu.matmul %55, %7, %cst_22 {dimension_numbers = #tpu.dot_dimension_numbers<[1], [0], [0], [1], [0, 0, 1, 1], [], []>} : vector<8x64xf32>, vector<64x256xf32>, vector<8x256xf32> -> vector<8x256xf32>
    %c16 = arith.constant 16 : index
    %c0_23 = arith.constant 0 : index
    %57 = vector.load %arg8[%c16, %c0_23] : memref<64x256xf32, #tpu.memory_space<vmem>>, vector<8x256xf32>
    %58 = arith.addf %56, %57 : vector<8x256xf32>
    %59 = arith.negf %58 : vector<8x256xf32>
    %60 = math.exp %59 : vector<8x256xf32>
    %cst_24 = arith.constant 1.000000e+00 : f32
    %61 = vector.broadcast %cst_24 : f32 to vector<8x256xf32>
    %62 = arith.addf %61, %60 : vector<8x256xf32>
    %63 = arith.divf %61, %62 : vector<8x256xf32>
    %64 = vector.extract_strided_slice %63 {offsets = [0, 0], sizes = [8, 64], strides = [1, 1]} : vector<8x256xf32> to vector<8x64xf32>
    %65 = vector.extract_strided_slice %63 {offsets = [0, 64], sizes = [8, 64], strides = [1, 1]} : vector<8x256xf32> to vector<8x64xf32>
    %66 = vector.extract_strided_slice %63 {offsets = [0, 128], sizes = [8, 64], strides = [1, 1]} : vector<8x256xf32> to vector<8x64xf32>
    %cst_25 = arith.constant 2.000000e+00 : f32
    %67 = vector.broadcast %cst_25 : f32 to vector<8x64xf32>
    %68 = arith.mulf %67, %66 : vector<8x64xf32>
    %cst_26 = arith.constant 1.000000e+00 : f32
    %69 = vector.broadcast %cst_26 : f32 to vector<8x64xf32>
    %70 = arith.subf %68, %69 : vector<8x64xf32>
    %71 = vector.extract_strided_slice %63 {offsets = [0, 192], sizes = [8, 64], strides = [1, 1]} : vector<8x256xf32> to vector<8x64xf32>
    %72 = arith.mulf %65, %53 : vector<8x64xf32>
    %73 = arith.mulf %64, %70 : vector<8x64xf32>
    %74 = arith.addf %72, %73 : vector<8x64xf32>
    %75 = math.tanh %74 : vector<8x64xf32>
    %76 = arith.mulf %71, %75 : vector<8x64xf32>
    %cst_27 = arith.constant dense<0.000000e+00> : vector<8x256xf32>
    %77 = tpu.matmul %76, %7, %cst_27 {dimension_numbers = #tpu.dot_dimension_numbers<[1], [0], [0], [1], [0, 0, 1, 1], [], []>} : vector<8x64xf32>, vector<64x256xf32>, vector<8x256xf32> -> vector<8x256xf32>
    %c24 = arith.constant 24 : index
    %c0_28 = arith.constant 0 : index
    %78 = vector.load %arg8[%c24, %c0_28] : memref<64x256xf32, #tpu.memory_space<vmem>>, vector<8x256xf32>
    %79 = arith.addf %77, %78 : vector<8x256xf32>
    %80 = arith.negf %79 : vector<8x256xf32>
    %81 = math.exp %80 : vector<8x256xf32>
    %cst_29 = arith.constant 1.000000e+00 : f32
    %82 = vector.broadcast %cst_29 : f32 to vector<8x256xf32>
    %83 = arith.addf %82, %81 : vector<8x256xf32>
    %84 = arith.divf %82, %83 : vector<8x256xf32>
    %85 = vector.extract_strided_slice %84 {offsets = [0, 0], sizes = [8, 64], strides = [1, 1]} : vector<8x256xf32> to vector<8x64xf32>
    %86 = vector.extract_strided_slice %84 {offsets = [0, 64], sizes = [8, 64], strides = [1, 1]} : vector<8x256xf32> to vector<8x64xf32>
    %87 = vector.extract_strided_slice %84 {offsets = [0, 128], sizes = [8, 64], strides = [1, 1]} : vector<8x256xf32> to vector<8x64xf32>
    %cst_30 = arith.constant 2.000000e+00 : f32
    %88 = vector.broadcast %cst_30 : f32 to vector<8x64xf32>
    %89 = arith.mulf %88, %87 : vector<8x64xf32>
    %cst_31 = arith.constant 1.000000e+00 : f32
    %90 = vector.broadcast %cst_31 : f32 to vector<8x64xf32>
    %91 = arith.subf %89, %90 : vector<8x64xf32>
    %92 = vector.extract_strided_slice %84 {offsets = [0, 192], sizes = [8, 64], strides = [1, 1]} : vector<8x256xf32> to vector<8x64xf32>
    %93 = arith.mulf %86, %74 : vector<8x64xf32>
    %94 = arith.mulf %85, %91 : vector<8x64xf32>
    %95 = arith.addf %93, %94 : vector<8x64xf32>
    %96 = math.tanh %95 : vector<8x64xf32>
    %97 = arith.mulf %92, %96 : vector<8x64xf32>
    %cst_32 = arith.constant dense<0.000000e+00> : vector<8x256xf32>
    %98 = tpu.matmul %97, %7, %cst_32 {dimension_numbers = #tpu.dot_dimension_numbers<[1], [0], [0], [1], [0, 0, 1, 1], [], []>} : vector<8x64xf32>, vector<64x256xf32>, vector<8x256xf32> -> vector<8x256xf32>
    %c32 = arith.constant 32 : index
    %c0_33 = arith.constant 0 : index
    %99 = vector.load %arg8[%c32, %c0_33] : memref<64x256xf32, #tpu.memory_space<vmem>>, vector<8x256xf32>
    %100 = arith.addf %98, %99 : vector<8x256xf32>
    %101 = arith.negf %100 : vector<8x256xf32>
    %102 = math.exp %101 : vector<8x256xf32>
    %cst_34 = arith.constant 1.000000e+00 : f32
    %103 = vector.broadcast %cst_34 : f32 to vector<8x256xf32>
    %104 = arith.addf %103, %102 : vector<8x256xf32>
    %105 = arith.divf %103, %104 : vector<8x256xf32>
    %106 = vector.extract_strided_slice %105 {offsets = [0, 0], sizes = [8, 64], strides = [1, 1]} : vector<8x256xf32> to vector<8x64xf32>
    %107 = vector.extract_strided_slice %105 {offsets = [0, 64], sizes = [8, 64], strides = [1, 1]} : vector<8x256xf32> to vector<8x64xf32>
    %108 = vector.extract_strided_slice %105 {offsets = [0, 128], sizes = [8, 64], strides = [1, 1]} : vector<8x256xf32> to vector<8x64xf32>
    %cst_35 = arith.constant 2.000000e+00 : f32
    %109 = vector.broadcast %cst_35 : f32 to vector<8x64xf32>
    %110 = arith.mulf %109, %108 : vector<8x64xf32>
    %cst_36 = arith.constant 1.000000e+00 : f32
    %111 = vector.broadcast %cst_36 : f32 to vector<8x64xf32>
    %112 = arith.subf %110, %111 : vector<8x64xf32>
    %113 = vector.extract_strided_slice %105 {offsets = [0, 192], sizes = [8, 64], strides = [1, 1]} : vector<8x256xf32> to vector<8x64xf32>
    %114 = arith.mulf %107, %95 : vector<8x64xf32>
    %115 = arith.mulf %106, %112 : vector<8x64xf32>
    %116 = arith.addf %114, %115 : vector<8x64xf32>
    %117 = math.tanh %116 : vector<8x64xf32>
    %118 = arith.mulf %113, %117 : vector<8x64xf32>
    %cst_37 = arith.constant dense<0.000000e+00> : vector<8x256xf32>
    %119 = tpu.matmul %118, %7, %cst_37 {dimension_numbers = #tpu.dot_dimension_numbers<[1], [0], [0], [1], [0, 0, 1, 1], [], []>} : vector<8x64xf32>, vector<64x256xf32>, vector<8x256xf32> -> vector<8x256xf32>
    %c40 = arith.constant 40 : index
    %c0_38 = arith.constant 0 : index
    %120 = vector.load %arg8[%c40, %c0_38] : memref<64x256xf32, #tpu.memory_space<vmem>>, vector<8x256xf32>
    %121 = arith.addf %119, %120 : vector<8x256xf32>
    %122 = arith.negf %121 : vector<8x256xf32>
    %123 = math.exp %122 : vector<8x256xf32>
    %cst_39 = arith.constant 1.000000e+00 : f32
    %124 = vector.broadcast %cst_39 : f32 to vector<8x256xf32>
    %125 = arith.addf %124, %123 : vector<8x256xf32>
    %126 = arith.divf %124, %125 : vector<8x256xf32>
    %127 = vector.extract_strided_slice %126 {offsets = [0, 0], sizes = [8, 64], strides = [1, 1]} : vector<8x256xf32> to vector<8x64xf32>
    %128 = vector.extract_strided_slice %126 {offsets = [0, 64], sizes = [8, 64], strides = [1, 1]} : vector<8x256xf32> to vector<8x64xf32>
    %129 = vector.extract_strided_slice %126 {offsets = [0, 128], sizes = [8, 64], strides = [1, 1]} : vector<8x256xf32> to vector<8x64xf32>
    %cst_40 = arith.constant 2.000000e+00 : f32
    %130 = vector.broadcast %cst_40 : f32 to vector<8x64xf32>
    %131 = arith.mulf %130, %129 : vector<8x64xf32>
    %cst_41 = arith.constant 1.000000e+00 : f32
    %132 = vector.broadcast %cst_41 : f32 to vector<8x64xf32>
    %133 = arith.subf %131, %132 : vector<8x64xf32>
    %134 = vector.extract_strided_slice %126 {offsets = [0, 192], sizes = [8, 64], strides = [1, 1]} : vector<8x256xf32> to vector<8x64xf32>
    %135 = arith.mulf %128, %116 : vector<8x64xf32>
    %136 = arith.mulf %127, %133 : vector<8x64xf32>
    %137 = arith.addf %135, %136 : vector<8x64xf32>
    %138 = math.tanh %137 : vector<8x64xf32>
    %139 = arith.mulf %134, %138 : vector<8x64xf32>
    %cst_42 = arith.constant dense<0.000000e+00> : vector<8x256xf32>
    %140 = tpu.matmul %139, %7, %cst_42 {dimension_numbers = #tpu.dot_dimension_numbers<[1], [0], [0], [1], [0, 0, 1, 1], [], []>} : vector<8x64xf32>, vector<64x256xf32>, vector<8x256xf32> -> vector<8x256xf32>
    %c48 = arith.constant 48 : index
    %c0_43 = arith.constant 0 : index
    %141 = vector.load %arg8[%c48, %c0_43] : memref<64x256xf32, #tpu.memory_space<vmem>>, vector<8x256xf32>
    %142 = arith.addf %140, %141 : vector<8x256xf32>
    %143 = arith.negf %142 : vector<8x256xf32>
    %144 = math.exp %143 : vector<8x256xf32>
    %cst_44 = arith.constant 1.000000e+00 : f32
    %145 = vector.broadcast %cst_44 : f32 to vector<8x256xf32>
    %146 = arith.addf %145, %144 : vector<8x256xf32>
    %147 = arith.divf %145, %146 : vector<8x256xf32>
    %148 = vector.extract_strided_slice %147 {offsets = [0, 0], sizes = [8, 64], strides = [1, 1]} : vector<8x256xf32> to vector<8x64xf32>
    %149 = vector.extract_strided_slice %147 {offsets = [0, 64], sizes = [8, 64], strides = [1, 1]} : vector<8x256xf32> to vector<8x64xf32>
    %150 = vector.extract_strided_slice %147 {offsets = [0, 128], sizes = [8, 64], strides = [1, 1]} : vector<8x256xf32> to vector<8x64xf32>
    %cst_45 = arith.constant 2.000000e+00 : f32
    %151 = vector.broadcast %cst_45 : f32 to vector<8x64xf32>
    %152 = arith.mulf %151, %150 : vector<8x64xf32>
    %cst_46 = arith.constant 1.000000e+00 : f32
    %153 = vector.broadcast %cst_46 : f32 to vector<8x64xf32>
    %154 = arith.subf %152, %153 : vector<8x64xf32>
    %155 = vector.extract_strided_slice %147 {offsets = [0, 192], sizes = [8, 64], strides = [1, 1]} : vector<8x256xf32> to vector<8x64xf32>
    %156 = arith.mulf %149, %137 : vector<8x64xf32>
    %157 = arith.mulf %148, %154 : vector<8x64xf32>
    %158 = arith.addf %156, %157 : vector<8x64xf32>
    %159 = math.tanh %158 : vector<8x64xf32>
    %160 = arith.mulf %155, %159 : vector<8x64xf32>
    %cst_47 = arith.constant dense<0.000000e+00> : vector<8x256xf32>
    %161 = tpu.matmul %160, %7, %cst_47 {dimension_numbers = #tpu.dot_dimension_numbers<[1], [0], [0], [1], [0, 0, 1, 1], [], []>} : vector<8x64xf32>, vector<64x256xf32>, vector<8x256xf32> -> vector<8x256xf32>
    %c56 = arith.constant 56 : index
    %c0_48 = arith.constant 0 : index
    %162 = vector.load %arg8[%c56, %c0_48] : memref<64x256xf32, #tpu.memory_space<vmem>>, vector<8x256xf32>
    %163 = arith.addf %161, %162 : vector<8x256xf32>
    %164 = arith.negf %163 : vector<8x256xf32>
    %165 = math.exp %164 : vector<8x256xf32>
    %cst_49 = arith.constant 1.000000e+00 : f32
    %166 = vector.broadcast %cst_49 : f32 to vector<8x256xf32>
    %167 = arith.addf %166, %165 : vector<8x256xf32>
    %168 = arith.divf %166, %167 : vector<8x256xf32>
    %169 = vector.extract_strided_slice %168 {offsets = [0, 0], sizes = [8, 64], strides = [1, 1]} : vector<8x256xf32> to vector<8x64xf32>
    %170 = vector.extract_strided_slice %168 {offsets = [0, 64], sizes = [8, 64], strides = [1, 1]} : vector<8x256xf32> to vector<8x64xf32>
    %171 = vector.extract_strided_slice %168 {offsets = [0, 128], sizes = [8, 64], strides = [1, 1]} : vector<8x256xf32> to vector<8x64xf32>
    %cst_50 = arith.constant 2.000000e+00 : f32
    %172 = vector.broadcast %cst_50 : f32 to vector<8x64xf32>
    %173 = arith.mulf %172, %171 : vector<8x64xf32>
    %cst_51 = arith.constant 1.000000e+00 : f32
    %174 = vector.broadcast %cst_51 : f32 to vector<8x64xf32>
    %175 = arith.subf %173, %174 : vector<8x64xf32>
    %176 = vector.extract_strided_slice %168 {offsets = [0, 192], sizes = [8, 64], strides = [1, 1]} : vector<8x256xf32> to vector<8x64xf32>
    %177 = arith.mulf %170, %158 : vector<8x64xf32>
    %178 = arith.mulf %169, %175 : vector<8x64xf32>
    %179 = arith.addf %177, %178 : vector<8x64xf32>
    %180 = math.tanh %179 : vector<8x64xf32>
    %181 = arith.mulf %176, %180 : vector<8x64xf32>
    %cst_52 = arith.constant dense<0.000000e+00> : vector<8x256xf32>
    %182 = tpu.matmul %181, %7, %cst_52 {dimension_numbers = #tpu.dot_dimension_numbers<[1], [0], [0], [1], [0, 0, 1, 1], [], []>} : vector<8x64xf32>, vector<64x256xf32>, vector<8x256xf32> -> vector<8x256xf32>
    %c56_53 = arith.constant 56 : index
    %c0_54 = arith.constant 0 : index
    %183 = vector.load %arg8[%c56_53, %c0_54] : memref<64x256xf32, #tpu.memory_space<vmem>>, vector<8x256xf32>
    %184 = arith.addf %182, %183 : vector<8x256xf32>
    %185 = arith.negf %184 : vector<8x256xf32>
    %186 = math.exp %185 : vector<8x256xf32>
    %cst_55 = arith.constant 1.000000e+00 : f32
    %187 = vector.broadcast %cst_55 : f32 to vector<8x256xf32>
    %188 = arith.addf %187, %186 : vector<8x256xf32>
    %189 = arith.divf %187, %188 : vector<8x256xf32>
    %190 = vector.extract_strided_slice %189 {offsets = [0, 0], sizes = [8, 64], strides = [1, 1]} : vector<8x256xf32> to vector<8x64xf32>
    %191 = vector.extract_strided_slice %189 {offsets = [0, 64], sizes = [8, 64], strides = [1, 1]} : vector<8x256xf32> to vector<8x64xf32>
    %192 = vector.extract_strided_slice %189 {offsets = [0, 128], sizes = [8, 64], strides = [1, 1]} : vector<8x256xf32> to vector<8x64xf32>
    %cst_56 = arith.constant 2.000000e+00 : f32
    %193 = vector.broadcast %cst_56 : f32 to vector<8x64xf32>
    %194 = arith.mulf %193, %192 : vector<8x64xf32>
    %cst_57 = arith.constant 1.000000e+00 : f32
    %195 = vector.broadcast %cst_57 : f32 to vector<8x64xf32>
    %196 = arith.subf %194, %195 : vector<8x64xf32>
    %197 = vector.extract_strided_slice %189 {offsets = [0, 192], sizes = [8, 64], strides = [1, 1]} : vector<8x256xf32> to vector<8x64xf32>
    %198 = arith.mulf %191, %179 : vector<8x64xf32>
    %199 = arith.mulf %190, %196 : vector<8x64xf32>
    %200 = arith.addf %198, %199 : vector<8x64xf32>
    %201 = math.tanh %200 : vector<8x64xf32>
    %202 = arith.mulf %197, %201 : vector<8x64xf32>
    %203 = vector.extract_strided_slice %202 {offsets = [0, 32], sizes = [8, 32], strides = [1, 1]} : vector<8x64xf32> to vector<8x32xf32>
    %c0_58 = arith.constant 0 : index
    %c0_59 = arith.constant 0 : index
    %204 = vector.load %arg5[%c0_58, %c0_59] : memref<1x32xf32, #tpu.memory_space<vmem>>, vector<1x32xf32>
    %205 = vector.broadcast %204 : vector<1x32xf32> to vector<8x32xf32>
    %206 = arith.mulf %203, %205 : vector<8x32xf32>
    %cst_60 = arith.constant dense<0.000000e+00> : vector<8xf32>
    %207 = vector.multi_reduction <add>, %206, %cst_60 [1] : vector<8x32xf32> to vector<8xf32>
    %208 = vector.shape_cast %207 : vector<8xf32> to vector<8x1xf32>
    %c0_61 = arith.constant 0 : index
    %c0_62 = arith.constant 0 : index
    %209 = vector.load %arg6[%c0_61, %c0_62] : memref<1x1xf32, #tpu.memory_space<vmem>>, vector<1x1xf32>
    %210 = vector.broadcast %209 : vector<1x1xf32> to vector<8x1xf32>
    %211 = arith.addf %208, %210 : vector<8x1xf32>
    %c0_63 = arith.constant 0 : index
    %c0_64 = arith.constant 0 : index
    %212 = vector.load %arg7[%c0_63, %c0_64] : memref<8x1xf32, #tpu.memory_space<vmem>>, vector<8x1xf32>
    tpu.vector_store %arg7[%c0_63, %c0_64], %211 {strides = array<i32>} : memref<8x1xf32, #tpu.memory_space<vmem>>, vector<8x1xf32>,
    return
  }
  func.func @transform_0(%arg0: i32) -> (i32, i32) {
    %c0_i32 = arith.constant 0 : i32
    %c0_i32_0 = arith.constant 0 : i32
    return %arg0, %c0_i32 : i32, i32
  }
  func.func @transform_1(%arg0: i32) -> (i32, i32) {
    %c0_i32 = arith.constant 0 : i32
    %c0_i32_0 = arith.constant 0 : i32
    %c0_i32_1 = arith.constant 0 : i32
    return %c0_i32, %c0_i32_0 : i32, i32
  }
  func.func @transform_2(%arg0: i32) -> (i32, i32) {
    %c0_i32 = arith.constant 0 : i32
    %c0_i32_0 = arith.constant 0 : i32
    %c0_i32_1 = arith.constant 0 : i32
    return %c0_i32, %c0_i32_0 : i32, i32
  }
  func.func @transform_3(%arg0: i32) -> (i32, i32) {
    %c0_i32 = arith.constant 0 : i32
    %c0_i32_0 = arith.constant 0 : i32
    %c0_i32_1 = arith.constant 0 : i32
    return %c0_i32, %c0_i32_0 : i32, i32
  }
  func.func @transform_4(%arg0: i32) -> (i32, i32) {
    %c0_i32 = arith.constant 0 : i32
    %c0_i32_0 = arith.constant 0 : i32
    %c0_i32_1 = arith.constant 0 : i32
    return %c0_i32, %c0_i32_0 : i32, i32
  }
  func.func @transform_5(%arg0: i32) -> (i32, i32) {
    %c0_i32 = arith.constant 0 : i32
    %c0_i32_0 = arith.constant 0 : i32
    %c0_i32_1 = arith.constant 0 : i32
    return %c0_i32, %c0_i32_0 : i32, i32
  }
  func.func @transform_6(%arg0: i32) -> (i32, i32) {
    %c0_i32 = arith.constant 0 : i32
    %c0_i32_0 = arith.constant 0 : i32
    return %arg0, %c0_i32 : i32, i32
  }
}

</mosaic_0001>

<llo_original>
// kernel: tpu_custom_call.1
$region0: #{tpu_custom_call.1}
  #allocation0 [shape = 'u32[]', space=smem, size = 0x4, offset = 0x4, fixed_abs, tag = 'smem constant byte address 0x4 - core index']
  #allocation1 [shape = 'u32[144,128]{1,0:T(1,128)}', space=vmem, size = 0x12000, scoped, tag = 'internal scratch']
  #allocation2 [shape = 'f32[64,256]{1,0:T(8,128)}', space=vmem, size = 0x10000, scoped, tag = 'scratch operand']
  #allocation3 [shape = 'f32[1,1]{1,0:T(1,128)S(1)}', space=vmem, size = 0x200, scoped, tag = 'scoped memory for tpu_custom_call.1']
  %s0 = inlined_call_operand.vmem [shape: f32[64,8], index: 0, kind: input, shape index: {}]
  %s1 = inlined_call_operand.vmem [shape: f32[8,256], index: 1, kind: input, shape index: {}]
  %s2 = inlined_call_operand.hbm [shape: f32[64,256], index: 2, kind: input, shape index: {}]
  %s3 = inlined_call_operand.vmem [shape: f32[1,256], index: 3, kind: input, shape index: {}]
  %s4 = inlined_call_operand.vmem [shape: f32[1,32], index: 4, kind: input, shape index: {}]
  %s5 = inlined_call_operand.<no memory space> [shape: f32[1,1], index: 5, kind: input, shape index: {}]
  %s6 = inlined_call_operand.vmem [shape: f32[8,1], index: 6, kind: output, shape index: {}]
  %s7 = sld [smem:[#allocation0]]
  $region38: #{tpu_custom_call.1} parent=0
    _
  %s9 = ssub.s32 1, %s7
  %s10 = scalar_select 0, %s9, %s7
  %v11 = vstv %s5
  %12 = vst [vmem:[#allocation3] sm:$0x1] %v11
  $region1: #{tpu_custom_call.1} parent=0
    #allocation4 [shape = 'u8[65536]{0}', space=vmem, size = 0x10000, scoped, tag = 'input window, operand 2, single buffered']
    #allocation5 [shape = 's32[1]{0}', space=sflag, size = 0x4, scoped, tag = 'scoped memory for tpu_custom_call.1']
    %13 = vsyncpa [#allocation5], 0
    // Predicated region
    $region2: #{tpu_custom_call.1} parent=1 // pred_check
      _
    $region3: #{tpu_custom_call.1} parent=1 // pred_check_branch
      %15 = sbr.rel (0) target = $region5
    $region4: #{tpu_custom_call.1} parent=1 // pred_region
      _
    $region5: #{tpu_custom_call.1} parent=1 // pred_fallthru
      _
    // Predicated region
    $region6: #{tpu_custom_call.1} parent=1 // pred_check
      _
    $region7: #{tpu_custom_call.1} parent=1 // pred_check_branch
      %17 = sbr.rel (0) target = $region9
    $region8: #{tpu_custom_call.1} parent=1 // pred_region
      _
    $region9: #{tpu_custom_call.1} parent=1 // pred_fallthru
      _
    // Predicated region
    $region10: #{tpu_custom_call.1} parent=1 // pred_check
      _
    $region11: #{tpu_custom_call.1} parent=1 // pred_check_branch
      %19 = sbr.rel (0) target = $region13
    $region12: #{tpu_custom_call.1} parent=1 // pred_region
      %s21 = ssub.s32 2048, 2048
      %22 = vsyncadd [#allocation5], %s21
      %s23 = sshll.u32 [#allocation4], 4
      %s24 = int_to_ptr.vmem [resolvable:$true] %s23
      %29 = dma.hbm_to_vmem [thread:$0]  %s2, 2048, %s24, [#allocation5], 256, 256, 16
    $region13: #{tpu_custom_call.1} parent=1 // pred_fallthru
      _
    // Predicated region
    $region14: #{tpu_custom_call.1} parent=1 // pred_check
      _
    $region15: #{tpu_custom_call.1} parent=1 // pred_check_branch
      %31 = sbr.rel (0) target = $region17
    $region16: #{tpu_custom_call.1} parent=1 // pred_region
      _
    $region17: #{tpu_custom_call.1} parent=1 // pred_fallthru
      _
    // Predicated region
    $region18: #{tpu_custom_call.1} parent=1 // pred_check
      _
    $region19: #{tpu_custom_call.1} parent=1 // pred_check_branch
      %33 = sbr.rel (0) target = $region21
    $region20: #{tpu_custom_call.1} parent=1 // pred_region
      _
    $region21: #{tpu_custom_call.1} parent=1 // pred_fallthru
      _
    // Predicated region
    $region22: #{tpu_custom_call.1} parent=1 // pred_check
      _
    $region23: #{tpu_custom_call.1} parent=1 // pred_check_branch
      %35 = sbr.rel (0) target = $region25
    $region24: #{tpu_custom_call.1} parent=1 // pred_region
      _
    $region25: #{tpu_custom_call.1} parent=1 // pred_fallthru
      _
    // Predicated region
    $region26: #{tpu_custom_call.1} parent=1 // pred_check
      _
    $region27: #{tpu_custom_call.1} parent=1 // pred_check_branch
      %37 = sbr.rel (0) target = $region29
    $region28: #{tpu_custom_call.1} parent=1 // pred_region
      %38 = dma.done [#allocation5], 2048
    $region29: #{tpu_custom_call.1} parent=1 // pred_fallthru
      _
    %v39 = vld [vmem:[%s0] sm:$0xff]
    %v40 = vld [vmem:[%s0 + $0x8] sm:$0xff]
    %v41 = vld [vmem:[%s0 + $0x10] sm:$0xff]
    %v42 = vld [vmem:[%s0 + $0x18] sm:$0xff]
    %v43 = vld [vmem:[%s0 + $0x20] sm:$0xff]
    %v44 = vld [vmem:[%s0 + $0x28] sm:$0xff]
    %v45 = vld [vmem:[%s0 + $0x30] sm:$0xff]
    %v46 = vld [vmem:[%s0 + $0x38] sm:$0xff]
    %v47 = vld [vmem:[%s1] sm:$0xff]
    %v48 = vld [vmem:[%s1 + $0x8] sm:$0xff]
    %v49 = vld [vmem:[%s3] sm:$0x3]
    %v51 = vlaneseq
    %v52 = vshrl.u32 %v51, 7
    %v53 = vsub.s32 0, %v52
    %v54 = vrot.slane %v49, %v53
    %v55 = vlaneseq
    %v56 = vshrl.u32 %v55, 7
    %v57 = vsub.s32 1, %v56
    %v58 = vrot.slane %v49, %v57
    %vm61 = vcmask 64512
    %v63 = vsel %vm61, %v39, 0
    %v66 = vsel %vm61, %v40, 0
    %v69 = vsel %vm61, %v41, 0
    %v72 = vsel %vm61, %v42, 0
    %v75 = vsel %vm61, %v43, 0
    %v78 = vsel %vm61, %v44, 0
    %v81 = vsel %vm61, %v45, 0
    %v84 = vsel %vm61, %v46, 0
    %86 = vmatprep.subr.mxu0 0.0
    %87 = vmatpush1.msra.mxu0 0.0
    %88 = vmatprep.subr.mxu0 0.0
    %89 = vmatpush1.msra.mxu0 0.0
    %90 = vmatprep.subr.mxu0 0.0
    %91 = vmatpush1.msra.mxu0 0.0
    %92 = vmatprep.subr.mxu0 0.0
    %93 = vmatpush1.msra.mxu0 0.0
    %94 = vmatprep.subr.mxu0 0.0
    %95 = vmatpush1.msra.mxu0 0.0
    %96 = vmatprep.subr.mxu0 0.0
    %97 = vmatpush1.msra.mxu0 0.0
    %98 = vmatprep.subr.mxu0 0.0
    %99 = vmatpush1.msra.mxu0 0.0
    %100 = vmatprep.subr.mxu0 0.0
    %101 = vmatpush1.msra.mxu0 0.0
    %102 = vmatprep.subr.mxu0 0.0
    %103 = vmatpush1.msra.mxu0 0.0
    %104 = vmatprep.subr.mxu0 0.0
    %105 = vmatpush1.msra.mxu0 0.0
    %106 = vmatprep.subr.mxu0 0.0
    %107 = vmatpush1.msra.mxu0 0.0
    %108 = vmatprep.subr.mxu0 0.0
    %109 = vmatpush1.msra.mxu0 0.0
    %110 = vmatprep.subr.mxu0 0.0
    %111 = vmatpush1.msra.mxu0 0.0
    %112 = vmatprep.subr.mxu0 0.0
    %113 = vmatpush1.msra.mxu0 0.0
    %114 = vmatprep.subr.mxu0 0.0
    %115 = vmatpush1.msra.mxu0 0.0
    %116 = vmatprep.subr.mxu0 %v48
    %117 = vmatpush1.msra.mxu0 %v47
    %118 = vmatprep.subr.mxu0 0.0
    %119 = vmatpush2.msra.mxu0 0.0
    %120 = vmatprep.subr.mxu0 0.0
    %121 = vmatpush2.msra.mxu0 0.0
    %122 = vmatprep.subr.mxu0 0.0
    %123 = vmatpush2.msra.mxu0 0.0
    %124 = vmatprep.subr.mxu0 0.0
    %125 = vmatpush2.msra.mxu0 0.0
    %126 = vmatprep.subr.mxu0 0.0
    %127 = vmatpush2.msra.mxu0 0.0
    %128 = vmatprep.subr.mxu0 0.0
    %129 = vmatpush2.msra.mxu0 0.0
    %130 = vmatprep.subr.mxu0 0.0
    %131 = vmatpush2.msra.mxu0 0.0
    %132 = vmatprep.subr.mxu0 0.0
    %133 = vmatpush2.msra.mxu0 0.0
    %134 = vmatprep.subr.mxu0 0.0
    %135 = vmatpush2.msra.mxu0 0.0
    %136 = vmatprep.subr.mxu0 0.0
    %137 = vmatpush2.msra.mxu0 0.0
    %138 = vmatprep.subr.mxu0 0.0
    %139 = vmatpush2.msra.mxu0 0.0
    %140 = vmatprep.subr.mxu0 0.0
    %141 = vmatpush2.msra.mxu0 0.0
    %142 = vmatprep.subr.mxu0 0.0
    %143 = vmatpush2.msra.mxu0 0.0
    %144 = vmatprep.subr.mxu0 0.0
    %145 = vmatpush2.msra.mxu0 0.0
    %146 = vmatprep.subr.mxu0 0.0
    %147 = vmatpush2.msra.mxu0 0.0
    %148 = vmatprep.subr.mxu0 0.0
    %149 = vmatpush2.msra.mxu0 0.0
    %150 = vmatprep.mubr.f32.mxu0 0.0
    %151 = vmatmul.mubr.f32.gmra.mxu0 %v63
    %v152 = vpop.f32.mrf.mxu0
    %v153 = vadd.f32 %v54, %v152
    %v154 = vpop.f32.mrf.mxu0
    %v155 = vadd.f32 %v58, %v154
    %156 = vmatprep.mubr.f32.mxu0 0.0
    %157 = vmatmul.mubr.f32.gmra.mxu0 %v66
    %v158 = vpop.f32.mrf.mxu0
    %v159 = vadd.f32 %v54, %v158
    %v160 = vpop.f32.mrf.mxu0
    %v161 = vadd.f32 %v58, %v160
    %162 = vmatprep.mubr.f32.mxu0 0.0
    %163 = vmatmul.mubr.f32.gmra.mxu0 %v69
    %v164 = vpop.f32.mrf.mxu0
    %v165 = vadd.f32 %v54, %v164
    %v166 = vpop.f32.mrf.mxu0
    %v167 = vadd.f32 %v58, %v166
    %168 = vmatprep.mubr.f32.mxu0 0.0
    %169 = vmatmul.mubr.f32.gmra.mxu0 %v72
    %v170 = vpop.f32.mrf.mxu0
    %v171 = vadd.f32 %v54, %v170
    %v172 = vpop.f32.mrf.mxu0
    %v173 = vadd.f32 %v58, %v172
    %174 = vmatprep.mubr.f32.mxu0 0.0
    %175 = vmatmul.mubr.f32.gmra.mxu0 %v75
    %v176 = vpop.f32.mrf.mxu0
    %v177 = vadd.f32 %v54, %v176
    %v178 = vpop.f32.mrf.mxu0
    %v179 = vadd.f32 %v58, %v178
    %180 = vmatprep.mubr.f32.mxu0 0.0
    %181 = vmatmul.mubr.f32.gmra.mxu0 %v78
    %v182 = vpop.f32.mrf.mxu0
    %v183 = vadd.f32 %v54, %v182
    %v184 = vpop.f32.mrf.mxu0
    %v185 = vadd.f32 %v58, %v184
    %186 = vmatprep.mubr.f32.mxu0 0.0
    %187 = vmatmul.mubr.f32.gmra.mxu0 %v81
    %v188 = vpop.f32.mrf.mxu0
    %v189 = vadd.f32 %v54, %v188
    %v190 = vpop.f32.mrf.mxu0
    %v191 = vadd.f32 %v58, %v190
    %192 = vmatprep.mubr.f32.mxu0 0.0
    %193 = vmatmul.mubr.f32.gmra.mxu0 %v84
    %v194 = vpop.f32.mrf.mxu0
    %v195 = vadd.f32 %v54, %v194
    %v196 = vpop.f32.mrf.mxu0
    %v197 = vadd.f32 %v58, %v196
    %198 = vdwg.mxu0
    %199 = vst [vmem:[#allocation2] sm:$0xff] %v153
    %200 = vst [vmem:[#allocation2 + $0x8] sm:$0xff] %v155
    %201 = vst [vmem:[#allocation2 + $0x10] sm:$0xff] %v159
    %202 = vst [vmem:[#allocation2 + $0x18] sm:$0xff] %v161
    %203 = vst [vmem:[#allocation2 + $0x20] sm:$0xff] %v165
    %204 = vst [vmem:[#allocation2 + $0x28] sm:$0xff] %v167
    %205 = vst [vmem:[#allocation2 + $0x30] sm:$0xff] %v171
    %206 = vst [vmem:[#allocation2 + $0x38] sm:$0xff] %v173
    %207 = vst [vmem:[#allocation2 + $0x40] sm:$0xff] %v177
    %208 = vst [vmem:[#allocation2 + $0x48] sm:$0xff] %v179
    %209 = vst [vmem:[#allocation2 + $0x50] sm:$0xff] %v183
    %210 = vst [vmem:[#allocation2 + $0x58] sm:$0xff] %v185
    %211 = vst [vmem:[#allocation2 + $0x60] sm:$0xff] %v189
    %212 = vst [vmem:[#allocation2 + $0x68] sm:$0xff] %v191
    %213 = vst [vmem:[#allocation2 + $0x70] sm:$0xff] %v195
    %214 = vst [vmem:[#allocation2 + $0x78] sm:$0xff] %v197
    %v215 = vld [vmem:[#allocation4] sm:$0xff]
    %v216 = vld [vmem:[#allocation4 + $0x8] sm:$0xff]
    %v217 = vld [vmem:[#allocation4 + $0x10] sm:$0xff]
    %v218 = vld [vmem:[#allocation4 + $0x18] sm:$0xff]
    %v219 = vld [vmem:[#allocation4 + $0x20] sm:$0xff]
    %v220 = vld [vmem:[#allocation4 + $0x28] sm:$0xff]
    %v221 = vld [vmem:[#allocation4 + $0x30] sm:$0xff]
    %v222 = vld [vmem:[#allocation4 + $0x38] sm:$0xff]
    %v223 = vld [vmem:[#allocation4 + $0x40] sm:$0xff]
    %v224 = vld [vmem:[#allocation4 + $0x48] sm:$0xff]
    %v225 = vld [vmem:[#allocation4 + $0x50] sm:$0xff]
    %v226 = vld [vmem:[#allocation4 + $0x58] sm:$0xff]
    %v227 = vld [vmem:[#allocation4 + $0x60] sm:$0xff]
    %v228 = vld [vmem:[#allocation4 + $0x68] sm:$0xff]
    %v229 = vld [vmem:[#allocation4 + $0x70] sm:$0xff]
    %v230 = vld [vmem:[#allocation4 + $0x78] sm:$0xff]
    %v231 = vld [vmem:[#allocation2] sm:$0xff]
    %v232 = vld [vmem:[#allocation2 + $0x8] sm:$0xff]
    %v233 = vxor.u32 %v231, 2147483648
    %v234 = vxor.u32 %v232, 2147483648
    %v235 = vmul.f32 %v233, 1.442695
    %v236 = vpow.pop %v235
    %v237 = vmul.f32 %v234, 1.442695
    %v238 = vpow.pop %v237
    %v239 = vadd.f32 %v236, 1.0
    %v240 = vadd.f32 %v238, 1.0
    %v241 = vrcp.pop %v239
    %v242 = vmul.f32 1.0, %v241
    %v243 = vrcp.pop %v240
    %v244 = vmul.f32 1.0, %v243
    %v245 = vmul.f32 %v244, 2.0
    %v246 = vsub.f32 %v245, 1.0
    %v247 = vmul.f32 %v242, 0.0
    %v248 = vmul.f32 %v242, %v246
    %250 = vrot.lane.b32.xlu0 %v248, 64
    %v251 = vpop.permute.xlu0 %250
    %v253 = vadd.f32 %v247, %v251
    %v254 = vtanh.pop %v253
    %v255 = vmul.f32 %v244, %v254
    %v256 = vlaneseq
    %v257 = vand.u32 %v256, 127
    %vm258 = vcmp.lt.s32.totalorder %v257, 32
    %260 = vrot.lane.b32.xlu0 %v255, 64
    %v261 = vpop.permute.xlu0 %260
    %v263 = vsel %vm258, %v261, 0.0
    %265 = vrot.lane.b32.xlu0 %v253, 64
    %v266 = vpop.permute.xlu0 %265
    %v268 = vsel %vm258, %v266, 0.0
    %v269 = vld [vmem:[#allocation2 + $0x10] sm:$0xff]
    %v270 = vld [vmem:[#allocation2 + $0x18] sm:$0xff]
    %vm271 = vcmask 523264
    %v273 = vsel %vm271, %v263, 0
    %275 = vmatprep.subr.mxu0 0.0
    %276 = vmatpush1.msra.mxu0 0.0
    %277 = vmatprep.subr.mxu0 0.0
    %278 = vmatpush1.msra.mxu0 0.0
    %279 = vmatprep.subr.mxu0 0.0
    %280 = vmatpush1.msra.mxu0 0.0
    %281 = vmatprep.subr.mxu0 0.0
    %282 = vmatpush1.msra.mxu0 0.0
    %283 = vmatprep.subr.mxu0 0.0
    %284 = vmatpush1.msra.mxu0 0.0
    %285 = vmatprep.subr.mxu0 0.0
    %286 = vmatpush1.msra.mxu0 0.0
    %287 = vmatprep.subr.mxu0 0.0
    %288 = vmatpush1.msra.mxu0 0.0
    %289 = vmatprep.subr.mxu0 0.0
    %290 = vmatpush1.msra.mxu0 0.0
    %291 = vmatprep.subr.mxu0 %v230
    %292 = vmatpush1.msra.mxu0 %v229
    %293 = vmatprep.subr.mxu0 %v228
    %294 = vmatpush1.msra.mxu0 %v227
    %295 = vmatprep.subr.mxu0 %v226
    %296 = vmatpush1.msra.mxu0 %v225
    %297 = vmatprep.subr.mxu0 %v224
    %298 = vmatpush1.msra.mxu0 %v223
    %299 = vmatprep.subr.mxu0 %v222
    %300 = vmatpush1.msra.mxu0 %v221
    %301 = vmatprep.subr.mxu0 %v220
    %302 = vmatpush1.msra.mxu0 %v219
    %303 = vmatprep.subr.mxu0 %v218
    %304 = vmatpush1.msra.mxu0 %v217
    %305 = vmatprep.subr.mxu0 %v216
    %306 = vmatpush1.msra.mxu0 %v215
    %307 = vmatprep.subr.mxu0 0.0
    %308 = vmatpush2.msra.mxu0 0.0
    %309 = vmatprep.subr.mxu0 0.0
    %310 = vmatpush2.msra.mxu0 0.0
    %311 = vmatprep.subr.mxu0 0.0
    %312 = vmatpush2.msra.mxu0 0.0
    %313 = vmatprep.subr.mxu0 0.0
    %314 = vmatpush2.msra.mxu0 0.0
    %315 = vmatprep.subr.mxu0 0.0
    %316 = vmatpush2.msra.mxu0 0.0
    %317 = vmatprep.subr.mxu0 0.0
    %318 = vmatpush2.msra.mxu0 0.0
    %319 = vmatprep.subr.mxu0 0.0
    %320 = vmatpush2.msra.mxu0 0.0
    %321 = vmatprep.subr.mxu0 0.0
    %322 = vmatpush2.msra.mxu0 0.0
    %323 = vmatprep.subr.mxu0 0.0
    %324 = vmatpush2.msra.mxu0 0.0
    %325 = vmatprep.subr.mxu0 0.0
    %326 = vmatpush2.msra.mxu0 0.0
    %327 = vmatprep.subr.mxu0 0.0
    %328 = vmatpush2.msra.mxu0 0.0
    %329 = vmatprep.subr.mxu0 0.0
    %330 = vmatpush2.msra.mxu0 0.0
    %331 = vmatprep.subr.mxu0 0.0
    %332 = vmatpush2.msra.mxu0 0.0
    %333 = vmatprep.subr.mxu0 0.0
    %334 = vmatpush2.msra.mxu0 0.0
    %335 = vmatprep.subr.mxu0 0.0
    %336 = vmatpush2.msra.mxu0 0.0
    %337 = vmatprep.subr.mxu0 0.0
    %338 = vmatpush2.msra.mxu0 0.0
    %339 = vmatprep.mubr.f32.mxu0 0.0
    %340 = vmatmul.mubr.f32.gmra.mxu0 %v273
    %v341 = vpop.f32.mrf.mxu0
    %v342 = vadd.f32 %v269, %v341
    %v343 = vpop.f32.mrf.mxu0
    %v344 = vadd.f32 %v270, %v343
    %345 = vdwg.mxu0
    %v346 = vxor.u32 %v342, 2147483648
    %v347 = vxor.u32 %v344, 2147483648
    %v348 = vmul.f32 %v346, 1.442695
    %v349 = vpow.pop %v348
    %v350 = vmul.f32 %v347, 1.442695
    %v351 = vpow.pop %v350
    %v352 = vadd.f32 %v349, 1.0
    %v353 = vadd.f32 %v351, 1.0
    %v354 = vrcp.pop %v352
    %v355 = vmul.f32 1.0, %v354
    %v356 = vrcp.pop %v353
    %v357 = vmul.f32 1.0, %v356
    %v358 = vmul.f32 %v357, 2.0
    %v359 = vsub.f32 %v358, 1.0
    %361 = vrot.lane.b32.xlu0 %v268, 64
    %v362 = vpop.permute.xlu0 %361
    %v364 = vmul.f32 %v355, %v362
    %v365 = vmul.f32 %v355, %v359
    %367 = vrot.lane.b32.xlu0 %v365, 64
    %v368 = vpop.permute.xlu0 %367
    %v370 = vadd.f32 %v364, %v368
    %v371 = vtanh.pop %v370
    %v372 = vmul.f32 %v357, %v371
    %v373 = vld [vmem:[#allocation2 + $0x20] sm:$0xff]
    %v374 = vld [vmem:[#allocation2 + $0x28] sm:$0xff]
    %376 = vrot.lane.b32.xlu0 %v372, 64
    %v377 = vpop.permute.xlu0 %376
    %v378 = vsel %vm271, %v377, 0
    %380 = vmatprep.subr.mxu0 0.0
    %381 = vmatpush1.msra.mxu0 0.0
    %382 = vmatprep.subr.mxu0 0.0
    %383 = vmatpush1.msra.mxu0 0.0
    %384 = vmatprep.subr.mxu0 0.0
    %385 = vmatpush1.msra.mxu0 0.0
    %386 = vmatprep.subr.mxu0 0.0
    %387 = vmatpush1.msra.mxu0 0.0
    %388 = vmatprep.subr.mxu0 0.0
    %389 = vmatpush1.msra.mxu0 0.0
    %390 = vmatprep.subr.mxu0 0.0
    %391 = vmatpush1.msra.mxu0 0.0
    %392 = vmatprep.subr.mxu0 0.0
    %393 = vmatpush1.msra.mxu0 0.0
    %394 = vmatprep.subr.mxu0 0.0
    %395 = vmatpush1.msra.mxu0 0.0
    %396 = vmatprep.subr.mxu0 %v230
    %397 = vmatpush1.msra.mxu0 %v229
    %398 = vmatprep.subr.mxu0 %v228
    %399 = vmatpush1.msra.mxu0 %v227
    %400 = vmatprep.subr.mxu0 %v226
    %401 = vmatpush1.msra.mxu0 %v225
    %402 = vmatprep.subr.mxu0 %v224
    %403 = vmatpush1.msra.mxu0 %v223
    %404 = vmatprep.subr.mxu0 %v222
    %405 = vmatpush1.msra.mxu0 %v221
    %406 = vmatprep.subr.mxu0 %v220
    %407 = vmatpush1.msra.mxu0 %v219
    %408 = vmatprep.subr.mxu0 %v218
    %409 = vmatpush1.msra.mxu0 %v217
    %410 = vmatprep.subr.mxu0 %v216
    %411 = vmatpush1.msra.mxu0 %v215
    %412 = vmatprep.subr.mxu0 0.0
    %413 = vmatpush2.msra.mxu0 0.0
    %414 = vmatprep.subr.mxu0 0.0
    %415 = vmatpush2.msra.mxu0 0.0
    %416 = vmatprep.subr.mxu0 0.0
    %417 = vmatpush2.msra.mxu0 0.0
    %418 = vmatprep.subr.mxu0 0.0
    %419 = vmatpush2.msra.mxu0 0.0
    %420 = vmatprep.subr.mxu0 0.0
    %421 = vmatpush2.msra.mxu0 0.0
    %422 = vmatprep.subr.mxu0 0.0
    %423 = vmatpush2.msra.mxu0 0.0
    %424 = vmatprep.subr.mxu0 0.0
    %425 = vmatpush2.msra.mxu0 0.0
    %426 = vmatprep.subr.mxu0 0.0
    %427 = vmatpush2.msra.mxu0 0.0
    %428 = vmatprep.subr.mxu0 0.0
    %429 = vmatpush2.msra.mxu0 0.0
    %430 = vmatprep.subr.mxu0 0.0
    %431 = vmatpush2.msra.mxu0 0.0
    %432 = vmatprep.subr.mxu0 0.0
    %433 = vmatpush2.msra.mxu0 0.0
    %434 = vmatprep.subr.mxu0 0.0
    %435 = vmatpush2.msra.mxu0 0.0
    %436 = vmatprep.subr.mxu0 0.0
    %437 = vmatpush2.msra.mxu0 0.0
    %438 = vmatprep.subr.mxu0 0.0
    %439 = vmatpush2.msra.mxu0 0.0
    %440 = vmatprep.subr.mxu0 0.0
    %441 = vmatpush2.msra.mxu0 0.0
    %442 = vmatprep.subr.mxu0 0.0
    %443 = vmatpush2.msra.mxu0 0.0
    %444 = vmatprep.mubr.f32.mxu0 0.0
    %445 = vmatmul.mubr.f32.gmra.mxu0 %v378
    %v446 = vpop.f32.mrf.mxu0
    %v447 = vadd.f32 %v373, %v446
    %v448 = vpop.f32.mrf.mxu0
    %v449 = vadd.f32 %v374, %v448
    %450 = vdwg.mxu0
    %v451 = vxor.u32 %v447, 2147483648
    %v452 = vxor.u32 %v449, 2147483648
    %v453 = vmul.f32 %v451, 1.442695
    %v454 = vpow.pop %v453
    %v455 = vmul.f32 %v452, 1.442695
    %v456 = vpow.pop %v455
    %v457 = vadd.f32 %v454, 1.0
    %v458 = vadd.f32 %v456, 1.0
    %v459 = vrcp.pop %v457
    %v460 = vmul.f32 1.0, %v459
    %v461 = vrcp.pop %v458
    %v462 = vmul.f32 1.0, %v461
    %v463 = vmul.f32 %v462, 2.0
    %v464 = vsub.f32 %v463, 1.0
    %v465 = vmul.f32 %v460, %v370
    %v466 = vmul.f32 %v460, %v464
    %468 = vrot.lane.b32.xlu0 %v466, 64
    %v469 = vpop.permute.xlu0 %468
    %v471 = vadd.f32 %v465, %v469
    %v472 = vtanh.pop %v471
    %v473 = vmul.f32 %v462, %v472
    %v474 = vld [vmem:[#allocation2 + $0x30] sm:$0xff]
    %v475 = vld [vmem:[#allocation2 + $0x38] sm:$0xff]
    %477 = vrot.lane.b32.xlu0 %v473, 64
    %v478 = vpop.permute.xlu0 %477
    %v479 = vsel %vm271, %v478, 0
    %481 = vmatprep.subr.mxu0 0.0
    %482 = vmatpush1.msra.mxu0 0.0
    %483 = vmatprep.subr.mxu0 0.0
    %484 = vmatpush1.msra.mxu0 0.0
    %485 = vmatprep.subr.mxu0 0.0
    %486 = vmatpush1.msra.mxu0 0.0
    %487 = vmatprep.subr.mxu0 0.0
    %488 = vmatpush1.msra.mxu0 0.0
    %489 = vmatprep.subr.mxu0 0.0
    %490 = vmatpush1.msra.mxu0 0.0
    %491 = vmatprep.subr.mxu0 0.0
    %492 = vmatpush1.msra.mxu0 0.0
    %493 = vmatprep.subr.mxu0 0.0
    %494 = vmatpush1.msra.mxu0 0.0
    %495 = vmatprep.subr.mxu0 0.0
    %496 = vmatpush1.msra.mxu0 0.0
    %497 = vmatprep.subr.mxu0 %v230
    %498 = vmatpush1.msra.mxu0 %v229
    %499 = vmatprep.subr.mxu0 %v228
    %500 = vmatpush1.msra.mxu0 %v227
    %501 = vmatprep.subr.mxu0 %v226
    %502 = vmatpush1.msra.mxu0 %v225
    %503 = vmatprep.subr.mxu0 %v224
    %504 = vmatpush1.msra.mxu0 %v223
    %505 = vmatprep.subr.mxu0 %v222
    %506 = vmatpush1.msra.mxu0 %v221
    %507 = vmatprep.subr.mxu0 %v220
    %508 = vmatpush1.msra.mxu0 %v219
    %509 = vmatprep.subr.mxu0 %v218
    %510 = vmatpush1.msra.mxu0 %v217
    %511 = vmatprep.subr.mxu0 %v216
    %512 = vmatpush1.msra.mxu0 %v215
    %513 = vmatprep.subr.mxu0 0.0
    %514 = vmatpush2.msra.mxu0 0.0
    %515 = vmatprep.subr.mxu0 0.0
    %516 = vmatpush2.msra.mxu0 0.0
    %517 = vmatprep.subr.mxu0 0.0
    %518 = vmatpush2.msra.mxu0 0.0
    %519 = vmatprep.subr.mxu0 0.0
    %520 = vmatpush2.msra.mxu0 0.0
    %521 = vmatprep.subr.mxu0 0.0
    %522 = vmatpush2.msra.mxu0 0.0
    %523 = vmatprep.subr.mxu0 0.0
    %524 = vmatpush2.msra.mxu0 0.0
    %525 = vmatprep.subr.mxu0 0.0
    %526 = vmatpush2.msra.mxu0 0.0
    %527 = vmatprep.subr.mxu0 0.0
    %528 = vmatpush2.msra.mxu0 0.0
    %529 = vmatprep.subr.mxu0 0.0
    %530 = vmatpush2.msra.mxu0 0.0
    %531 = vmatprep.subr.mxu0 0.0
    %532 = vmatpush2.msra.mxu0 0.0
    %533 = vmatprep.subr.mxu0 0.0
    %534 = vmatpush2.msra.mxu0 0.0
    %535 = vmatprep.subr.mxu0 0.0
    %536 = vmatpush2.msra.mxu0 0.0
    %537 = vmatprep.subr.mxu0 0.0
    %538 = vmatpush2.msra.mxu0 0.0
    %539 = vmatprep.subr.mxu0 0.0
    %540 = vmatpush2.msra.mxu0 0.0
    %541 = vmatprep.subr.mxu0 0.0
    %542 = vmatpush2.msra.mxu0 0.0
    %543 = vmatprep.subr.mxu0 0.0
    %544 = vmatpush2.msra.mxu0 0.0
    %545 = vmatprep.mubr.f32.mxu0 0.0
    %546 = vmatmul.mubr.f32.gmra.mxu0 %v479
    %v547 = vpop.f32.mrf.mxu0
    %v548 = vadd.f32 %v474, %v547
    %v549 = vpop.f32.mrf.mxu0
    %v550 = vadd.f32 %v475, %v549
    %551 = vdwg.mxu0
    %v552 = vxor.u32 %v548, 2147483648
    %v553 = vxor.u32 %v550, 2147483648
    %v554 = vmul.f32 %v552, 1.442695
    %v555 = vpow.pop %v554
    %v556 = vmul.f32 %v553, 1.442695
    %v557 = vpow.pop %v556
    %v558 = vadd.f32 %v555, 1.0
    %v559 = vadd.f32 %v557, 1.0
    %v560 = vrcp.pop %v558
    %v561 = vmul.f32 1.0, %v560
    %v562 = vrcp.pop %v559
    %v563 = vmul.f32 1.0, %v562
    %v564 = vmul.f32 %v563, 2.0
    %v565 = vsub.f32 %v564, 1.0
    %v566 = vmul.f32 %v561, %v471
    %v567 = vmul.f32 %v561, %v565
    %569 = vrot.lane.b32.xlu0 %v567, 64
    %v570 = vpop.permute.xlu0 %569
    %v572 = vadd.f32 %v566, %v570
    %v573 = vtanh.pop %v572
    %v574 = vmul.f32 %v563, %v573
    %v575 = vld [vmem:[#allocation2 + $0x40] sm:$0xff]
    %v576 = vld [vmem:[#allocation2 + $0x48] sm:$0xff]
    %578 = vrot.lane.b32.xlu0 %v574, 64
    %v579 = vpop.permute.xlu0 %578
    %v580 = vsel %vm271, %v579, 0
    %582 = vmatprep.subr.mxu0 0.0
    %583 = vmatpush1.msra.mxu0 0.0
    %584 = vmatprep.subr.mxu0 0.0
    %585 = vmatpush1.msra.mxu0 0.0
    %586 = vmatprep.subr.mxu0 0.0
    %587 = vmatpush1.msra.mxu0 0.0
    %588 = vmatprep.subr.mxu0 0.0
    %589 = vmatpush1.msra.mxu0 0.0
    %590 = vmatprep.subr.mxu0 0.0
    %591 = vmatpush1.msra.mxu0 0.0
    %592 = vmatprep.subr.mxu0 0.0
    %593 = vmatpush1.msra.mxu0 0.0
    %594 = vmatprep.subr.mxu0 0.0
    %595 = vmatpush1.msra.mxu0 0.0
    %596 = vmatprep.subr.mxu0 0.0
    %597 = vmatpush1.msra.mxu0 0.0
    %598 = vmatprep.subr.mxu0 %v230
    %599 = vmatpush1.msra.mxu0 %v229
    %600 = vmatprep.subr.mxu0 %v228
    %601 = vmatpush1.msra.mxu0 %v227
    %602 = vmatprep.subr.mxu0 %v226
    %603 = vmatpush1.msra.mxu0 %v225
    %604 = vmatprep.subr.mxu0 %v224
    %605 = vmatpush1.msra.mxu0 %v223
    %606 = vmatprep.subr.mxu0 %v222
    %607 = vmatpush1.msra.mxu0 %v221
    %608 = vmatprep.subr.mxu0 %v220
    %609 = vmatpush1.msra.mxu0 %v219
    %610 = vmatprep.subr.mxu0 %v218
    %611 = vmatpush1.msra.mxu0 %v217
    %612 = vmatprep.subr.mxu0 %v216
    %613 = vmatpush1.msra.mxu0 %v215
    %614 = vmatprep.subr.mxu0 0.0
    %615 = vmatpush2.msra.mxu0 0.0
    %616 = vmatprep.subr.mxu0 0.0
    %617 = vmatpush2.msra.mxu0 0.0
    %618 = vmatprep.subr.mxu0 0.0
    %619 = vmatpush2.msra.mxu0 0.0
    %620 = vmatprep.subr.mxu0 0.0
    %621 = vmatpush2.msra.mxu0 0.0
    %622 = vmatprep.subr.mxu0 0.0
    %623 = vmatpush2.msra.mxu0 0.0
    %624 = vmatprep.subr.mxu0 0.0
    %625 = vmatpush2.msra.mxu0 0.0
    %626 = vmatprep.subr.mxu0 0.0
    %627 = vmatpush2.msra.mxu0 0.0
    %628 = vmatprep.subr.mxu0 0.0
    %629 = vmatpush2.msra.mxu0 0.0
    %630 = vmatprep.subr.mxu0 0.0
    %631 = vmatpush2.msra.mxu0 0.0
    %632 = vmatprep.subr.mxu0 0.0
    %633 = vmatpush2.msra.mxu0 0.0
    %634 = vmatprep.subr.mxu0 0.0
    %635 = vmatpush2.msra.mxu0 0.0
    %636 = vmatprep.subr.mxu0 0.0
    %637 = vmatpush2.msra.mxu0 0.0
    %638 = vmatprep.subr.mxu0 0.0
    %639 = vmatpush2.msra.mxu0 0.0
    %640 = vmatprep.subr.mxu0 0.0
    %641 = vmatpush2.msra.mxu0 0.0
    %642 = vmatprep.subr.mxu0 0.0
    %643 = vmatpush2.msra.mxu0 0.0
    %644 = vmatprep.subr.mxu0 0.0
    %645 = vmatpush2.msra.mxu0 0.0
    %646 = vmatprep.mubr.f32.mxu0 0.0
    %647 = vmatmul.mubr.f32.gmra.mxu0 %v580
    %v648 = vpop.f32.mrf.mxu0
    %v649 = vadd.f32 %v575, %v648
    %v650 = vpop.f32.mrf.mxu0
    %v651 = vadd.f32 %v576, %v650
    %652 = vdwg.mxu0
    %v653 = vxor.u32 %v649, 2147483648
    %v654 = vxor.u32 %v651, 2147483648
    %v655 = vmul.f32 %v653, 1.442695
    %v656 = vpow.pop %v655
    %v657 = vmul.f32 %v654, 1.442695
    %v658 = vpow.pop %v657
    %v659 = vadd.f32 %v656, 1.0
    %v660 = vadd.f32 %v658, 1.0
    %v661 = vrcp.pop %v659
    %v662 = vmul.f32 1.0, %v661
    %v663 = vrcp.pop %v660
    %v664 = vmul.f32 1.0, %v663
    %v665 = vmul.f32 %v664, 2.0
    %v666 = vsub.f32 %v665, 1.0
    %v667 = vmul.f32 %v662, %v572
    %v668 = vmul.f32 %v662, %v666
    %670 = vrot.lane.b32.xlu0 %v668, 64
    %v671 = vpop.permute.xlu0 %670
    %v673 = vadd.f32 %v667, %v671
    %v674 = vtanh.pop %v673
    %v675 = vmul.f32 %v664, %v674
    %v676 = vld [vmem:[#allocation2 + $0x50] sm:$0xff]
    %v677 = vld [vmem:[#allocation2 + $0x58] sm:$0xff]
    %679 = vrot.lane.b32.xlu0 %v675, 64
    %v680 = vpop.permute.xlu0 %679
    %v681 = vsel %vm271, %v680, 0
    %683 = vmatprep.subr.mxu0 0.0
    %684 = vmatpush1.msra.mxu0 0.0
    %685 = vmatprep.subr.mxu0 0.0
    %686 = vmatpush1.msra.mxu0 0.0
    %687 = vmatprep.subr.mxu0 0.0
    %688 = vmatpush1.msra.mxu0 0.0
    %689 = vmatprep.subr.mxu0 0.0
    %690 = vmatpush1.msra.mxu0 0.0
    %691 = vmatprep.subr.mxu0 0.0
    %692 = vmatpush1.msra.mxu0 0.0
    %693 = vmatprep.subr.mxu0 0.0
    %694 = vmatpush1.msra.mxu0 0.0
    %695 = vmatprep.subr.mxu0 0.0
    %696 = vmatpush1.msra.mxu0 0.0
    %697 = vmatprep.subr.mxu0 0.0
    %698 = vmatpush1.msra.mxu0 0.0
    %699 = vmatprep.subr.mxu0 %v230
    %700 = vmatpush1.msra.mxu0 %v229
    %701 = vmatprep.subr.mxu0 %v228
    %702 = vmatpush1.msra.mxu0 %v227
    %703 = vmatprep.subr.mxu0 %v226
    %704 = vmatpush1.msra.mxu0 %v225
    %705 = vmatprep.subr.mxu0 %v224
    %706 = vmatpush1.msra.mxu0 %v223
    %707 = vmatprep.subr.mxu0 %v222
    %708 = vmatpush1.msra.mxu0 %v221
    %709 = vmatprep.subr.mxu0 %v220
    %710 = vmatpush1.msra.mxu0 %v219
    %711 = vmatprep.subr.mxu0 %v218
    %712 = vmatpush1.msra.mxu0 %v217
    %713 = vmatprep.subr.mxu0 %v216
    %714 = vmatpush1.msra.mxu0 %v215
    %715 = vmatprep.subr.mxu0 0.0
    %716 = vmatpush2.msra.mxu0 0.0
    %717 = vmatprep.subr.mxu0 0.0
    %718 = vmatpush2.msra.mxu0 0.0
    %719 = vmatprep.subr.mxu0 0.0
    %720 = vmatpush2.msra.mxu0 0.0
    %721 = vmatprep.subr.mxu0 0.0
    %722 = vmatpush2.msra.mxu0 0.0
    %723 = vmatprep.subr.mxu0 0.0
    %724 = vmatpush2.msra.mxu0 0.0
    %725 = vmatprep.subr.mxu0 0.0
    %726 = vmatpush2.msra.mxu0 0.0
    %727 = vmatprep.subr.mxu0 0.0
    %728 = vmatpush2.msra.mxu0 0.0
    %729 = vmatprep.subr.mxu0 0.0
    %730 = vmatpush2.msra.mxu0 0.0
    %731 = vmatprep.subr.mxu0 0.0
    %732 = vmatpush2.msra.mxu0 0.0
    %733 = vmatprep.subr.mxu0 0.0
    %734 = vmatpush2.msra.mxu0 0.0
    %735 = vmatprep.subr.mxu0 0.0
    %736 = vmatpush2.msra.mxu0 0.0
    %737 = vmatprep.subr.mxu0 0.0
    %738 = vmatpush2.msra.mxu0 0.0
    %739 = vmatprep.subr.mxu0 0.0
    %740 = vmatpush2.msra.mxu0 0.0
    %741 = vmatprep.subr.mxu0 0.0
    %742 = vmatpush2.msra.mxu0 0.0
    %743 = vmatprep.subr.mxu0 0.0
    %744 = vmatpush2.msra.mxu0 0.0
    %745 = vmatprep.subr.mxu0 0.0
    %746 = vmatpush2.msra.mxu0 0.0
    %747 = vmatprep.mubr.f32.mxu0 0.0
    %748 = vmatmul.mubr.f32.gmra.mxu0 %v681
    %v749 = vpop.f32.mrf.mxu0
    %v750 = vadd.f32 %v676, %v749
    %v751 = vpop.f32.mrf.mxu0
    %v752 = vadd.f32 %v677, %v751
    %753 = vdwg.mxu0
    %v754 = vxor.u32 %v750, 2147483648
    %v755 = vxor.u32 %v752, 2147483648
    %v756 = vmul.f32 %v754, 1.442695
    %v757 = vpow.pop %v756
    %v758 = vmul.f32 %v755, 1.442695
    %v759 = vpow.pop %v758
    %v760 = vadd.f32 %v757, 1.0
    %v761 = vadd.f32 %v759, 1.0
    %v762 = vrcp.pop %v760
    %v763 = vmul.f32 1.0, %v762
    %v764 = vrcp.pop %v761
    %v765 = vmul.f32 1.0, %v764
    %v766 = vmul.f32 %v765, 2.0
    %v767 = vsub.f32 %v766, 1.0
    %v768 = vmul.f32 %v763, %v673
    %v769 = vmul.f32 %v763, %v767
    %771 = vrot.lane.b32.xlu0 %v769, 64
    %v772 = vpop.permute.xlu0 %771
    %v774 = vadd.f32 %v768, %v772
    %v775 = vtanh.pop %v774
    %v776 = vmul.f32 %v765, %v775
    %v777 = vld [vmem:[#allocation2 + $0x60] sm:$0xff]
    %v778 = vld [vmem:[#allocation2 + $0x68] sm:$0xff]
    %780 = vrot.lane.b32.xlu0 %v776, 64
    %v781 = vpop.permute.xlu0 %780
    %v782 = vsel %vm271, %v781, 0
    %784 = vmatprep.subr.mxu0 0.0
    %785 = vmatpush1.msra.mxu0 0.0
    %786 = vmatprep.subr.mxu0 0.0
    %787 = vmatpush1.msra.mxu0 0.0
    %788 = vmatprep.subr.mxu0 0.0
    %789 = vmatpush1.msra.mxu0 0.0
    %790 = vmatprep.subr.mxu0 0.0
    %791 = vmatpush1.msra.mxu0 0.0
    %792 = vmatprep.subr.mxu0 0.0
    %793 = vmatpush1.msra.mxu0 0.0
    %794 = vmatprep.subr.mxu0 0.0
    %795 = vmatpush1.msra.mxu0 0.0
    %796 = vmatprep.subr.mxu0 0.0
    %797 = vmatpush1.msra.mxu0 0.0
    %798 = vmatprep.subr.mxu0 0.0
    %799 = vmatpush1.msra.mxu0 0.0
    %800 = vmatprep.subr.mxu0 %v230
    %801 = vmatpush1.msra.mxu0 %v229
    %802 = vmatprep.subr.mxu0 %v228
    %803 = vmatpush1.msra.mxu0 %v227
    %804 = vmatprep.subr.mxu0 %v226
    %805 = vmatpush1.msra.mxu0 %v225
    %806 = vmatprep.subr.mxu0 %v224
    %807 = vmatpush1.msra.mxu0 %v223
    %808 = vmatprep.subr.mxu0 %v222
    %809 = vmatpush1.msra.mxu0 %v221
    %810 = vmatprep.subr.mxu0 %v220
    %811 = vmatpush1.msra.mxu0 %v219
    %812 = vmatprep.subr.mxu0 %v218
    %813 = vmatpush1.msra.mxu0 %v217
    %814 = vmatprep.subr.mxu0 %v216
    %815 = vmatpush1.msra.mxu0 %v215
    %816 = vmatprep.subr.mxu0 0.0
    %817 = vmatpush2.msra.mxu0 0.0
    %818 = vmatprep.subr.mxu0 0.0
    %819 = vmatpush2.msra.mxu0 0.0
    %820 = vmatprep.subr.mxu0 0.0
    %821 = vmatpush2.msra.mxu0 0.0
    %822 = vmatprep.subr.mxu0 0.0
    %823 = vmatpush2.msra.mxu0 0.0
    %824 = vmatprep.subr.mxu0 0.0
    %825 = vmatpush2.msra.mxu0 0.0
    %826 = vmatprep.subr.mxu0 0.0
    %827 = vmatpush2.msra.mxu0 0.0
    %828 = vmatprep.subr.mxu0 0.0
    %829 = vmatpush2.msra.mxu0 0.0
    %830 = vmatprep.subr.mxu0 0.0
    %831 = vmatpush2.msra.mxu0 0.0
    %832 = vmatprep.subr.mxu0 0.0
    %833 = vmatpush2.msra.mxu0 0.0
    %834 = vmatprep.subr.mxu0 0.0
    %835 = vmatpush2.msra.mxu0 0.0
    %836 = vmatprep.subr.mxu0 0.0
    %837 = vmatpush2.msra.mxu0 0.0
    %838 = vmatprep.subr.mxu0 0.0
    %839 = vmatpush2.msra.mxu0 0.0
    %840 = vmatprep.subr.mxu0 0.0
    %841 = vmatpush2.msra.mxu0 0.0
    %842 = vmatprep.subr.mxu0 0.0
    %843 = vmatpush2.msra.mxu0 0.0
    %844 = vmatprep.subr.mxu0 0.0
    %845 = vmatpush2.msra.mxu0 0.0
    %846 = vmatprep.subr.mxu0 0.0
    %847 = vmatpush2.msra.mxu0 0.0
    %848 = vmatprep.mubr.f32.mxu0 0.0
    %849 = vmatmul.mubr.f32.gmra.mxu0 %v782
    %v850 = vpop.f32.mrf.mxu0
    %v851 = vadd.f32 %v777, %v850
    %v852 = vpop.f32.mrf.mxu0
    %v853 = vadd.f32 %v778, %v852
    %854 = vdwg.mxu0
    %v855 = vxor.u32 %v851, 2147483648
    %v856 = vxor.u32 %v853, 2147483648
    %v857 = vmul.f32 %v855, 1.442695
    %v858 = vpow.pop %v857
    %v859 = vmul.f32 %v856, 1.442695
    %v860 = vpow.pop %v859
    %v861 = vadd.f32 %v858, 1.0
    %v862 = vadd.f32 %v860, 1.0
    %v863 = vrcp.pop %v861
    %v864 = vmul.f32 1.0, %v863
    %v865 = vrcp.pop %v862
    %v866 = vmul.f32 1.0, %v865
    %v867 = vmul.f32 %v866, 2.0
    %v868 = vsub.f32 %v867, 1.0
    %v869 = vmul.f32 %v864, %v774
    %v870 = vmul.f32 %v864, %v868
    %872 = vrot.lane.b32.xlu0 %v870, 64
    %v873 = vpop.permute.xlu0 %872
    %v875 = vadd.f32 %v869, %v873
    %v876 = vtanh.pop %v875
    %v877 = vmul.f32 %v866, %v876
    %v878 = vld [vmem:[#allocation2 + $0x70] sm:$0xff]
    %v879 = vld [vmem:[#allocation2 + $0x78] sm:$0xff]
    %881 = vrot.lane.b32.xlu0 %v877, 64
    %v882 = vpop.permute.xlu0 %881
    %v883 = vsel %vm271, %v882, 0
    %885 = vmatprep.subr.mxu0 0.0
    %886 = vmatpush1.msra.mxu0 0.0
    %887 = vmatprep.subr.mxu0 0.0
    %888 = vmatpush1.msra.mxu0 0.0
    %889 = vmatprep.subr.mxu0 0.0
    %890 = vmatpush1.msra.mxu0 0.0
    %891 = vmatprep.subr.mxu0 0.0
    %892 = vmatpush1.msra.mxu0 0.0
    %893 = vmatprep.subr.mxu0 0.0
    %894 = vmatpush1.msra.mxu0 0.0
    %895 = vmatprep.subr.mxu0 0.0
    %896 = vmatpush1.msra.mxu0 0.0
    %897 = vmatprep.subr.mxu0 0.0
    %898 = vmatpush1.msra.mxu0 0.0
    %899 = vmatprep.subr.mxu0 0.0
    %900 = vmatpush1.msra.mxu0 0.0
    %901 = vmatprep.subr.mxu0 %v230
    %902 = vmatpush1.msra.mxu0 %v229
    %903 = vmatprep.subr.mxu0 %v228
    %904 = vmatpush1.msra.mxu0 %v227
    %905 = vmatprep.subr.mxu0 %v226
    %906 = vmatpush1.msra.mxu0 %v225
    %907 = vmatprep.subr.mxu0 %v224
    %908 = vmatpush1.msra.mxu0 %v223
    %909 = vmatprep.subr.mxu0 %v222
    %910 = vmatpush1.msra.mxu0 %v221
    %911 = vmatprep.subr.mxu0 %v220
    %912 = vmatpush1.msra.mxu0 %v219
    %913 = vmatprep.subr.mxu0 %v218
    %914 = vmatpush1.msra.mxu0 %v217
    %915 = vmatprep.subr.mxu0 %v216
    %916 = vmatpush1.msra.mxu0 %v215
    %917 = vmatprep.subr.mxu0 0.0
    %918 = vmatpush2.msra.mxu0 0.0
    %919 = vmatprep.subr.mxu0 0.0
    %920 = vmatpush2.msra.mxu0 0.0
    %921 = vmatprep.subr.mxu0 0.0
    %922 = vmatpush2.msra.mxu0 0.0
    %923 = vmatprep.subr.mxu0 0.0
    %924 = vmatpush2.msra.mxu0 0.0
    %925 = vmatprep.subr.mxu0 0.0
    %926 = vmatpush2.msra.mxu0 0.0
    %927 = vmatprep.subr.mxu0 0.0
    %928 = vmatpush2.msra.mxu0 0.0
    %929 = vmatprep.subr.mxu0 0.0
    %930 = vmatpush2.msra.mxu0 0.0
    %931 = vmatprep.subr.mxu0 0.0
    %932 = vmatpush2.msra.mxu0 0.0
    %933 = vmatprep.subr.mxu0 0.0
    %934 = vmatpush2.msra.mxu0 0.0
    %935 = vmatprep.subr.mxu0 0.0
    %936 = vmatpush2.msra.mxu0 0.0
    %937 = vmatprep.subr.mxu0 0.0
    %938 = vmatpush2.msra.mxu0 0.0
    %939 = vmatprep.subr.mxu0 0.0
    %940 = vmatpush2.msra.mxu0 0.0
    %941 = vmatprep.subr.mxu0 0.0
    %942 = vmatpush2.msra.mxu0 0.0
    %943 = vmatprep.subr.mxu0 0.0
    %944 = vmatpush2.msra.mxu0 0.0
    %945 = vmatprep.subr.mxu0 0.0
    %946 = vmatpush2.msra.mxu0 0.0
    %947 = vmatprep.subr.mxu0 0.0
    %948 = vmatpush2.msra.mxu0 0.0
    %949 = vmatprep.mubr.f32.mxu0 0.0
    %950 = vmatmul.mubr.f32.gmra.mxu0 %v883
    %v951 = vpop.f32.mrf.mxu0
    %v952 = vadd.f32 %v878, %v951
    %v953 = vpop.f32.mrf.mxu0
    %v954 = vadd.f32 %v879, %v953
    %955 = vdwg.mxu0
    %v956 = vxor.u32 %v952, 2147483648
    %v957 = vxor.u32 %v954, 2147483648
    %v958 = vmul.f32 %v956, 1.442695
    %v959 = vpow.pop %v958
    %v960 = vmul.f32 %v957, 1.442695
    %v961 = vpow.pop %v960
    %v962 = vadd.f32 %v959, 1.0
    %v963 = vadd.f32 %v961, 1.0
    %v964 = vrcp.pop %v962
    %v965 = vmul.f32 1.0, %v964
    %v966 = vrcp.pop %v963
    %v967 = vmul.f32 1.0, %v966
    %v968 = vmul.f32 %v967, 2.0
    %v969 = vsub.f32 %v968, 1.0
    %v970 = vmul.f32 %v965, %v875
    %v971 = vmul.f32 %v965, %v969
    %973 = vrot.lane.b32.xlu0 %v971, 64
    %v974 = vpop.permute.xlu0 %973
    %v976 = vadd.f32 %v970, %v974
    %v977 = vtanh.pop %v976
    %v978 = vmul.f32 %v967, %v977
    %980 = vrot.lane.b32.xlu0 %v978, 64
    %v981 = vpop.permute.xlu0 %980
    %v982 = vsel %vm271, %v981, 0
    %984 = vmatprep.subr.mxu0 0.0
    %985 = vmatpush1.msra.mxu0 0.0
    %986 = vmatprep.subr.mxu0 0.0
    %987 = vmatpush1.msra.mxu0 0.0
    %988 = vmatprep.subr.mxu0 0.0
    %989 = vmatpush1.msra.mxu0 0.0
    %990 = vmatprep.subr.mxu0 0.0
    %991 = vmatpush1.msra.mxu0 0.0
    %992 = vmatprep.subr.mxu0 0.0
    %993 = vmatpush1.msra.mxu0 0.0
    %994 = vmatprep.subr.mxu0 0.0
    %995 = vmatpush1.msra.mxu0 0.0
    %996 = vmatprep.subr.mxu0 0.0
    %997 = vmatpush1.msra.mxu0 0.0
    %998 = vmatprep.subr.mxu0 0.0
    %999 = vmatpush1.msra.mxu0 0.0
    %1000 = vmatprep.subr.mxu0 %v230
    %1001 = vmatpush1.msra.mxu0 %v229
    %1002 = vmatprep.subr.mxu0 %v228
    %1003 = vmatpush1.msra.mxu0 %v227
    %1004 = vmatprep.subr.mxu0 %v226
    %1005 = vmatpush1.msra.mxu0 %v225
    %1006 = vmatprep.subr.mxu0 %v224
    %1007 = vmatpush1.msra.mxu0 %v223
    %1008 = vmatprep.subr.mxu0 %v222
    %1009 = vmatpush1.msra.mxu0 %v221
    %1010 = vmatprep.subr.mxu0 %v220
    %1011 = vmatpush1.msra.mxu0 %v219
    %1012 = vmatprep.subr.mxu0 %v218
    %1013 = vmatpush1.msra.mxu0 %v217
    %1014 = vmatprep.subr.mxu0 %v216
    %1015 = vmatpush1.msra.mxu0 %v215
    %1016 = vmatprep.subr.mxu0 0.0
    %1017 = vmatpush2.msra.mxu0 0.0
    %1018 = vmatprep.subr.mxu0 0.0
    %1019 = vmatpush2.msra.mxu0 0.0
    %1020 = vmatprep.subr.mxu0 0.0
    %1021 = vmatpush2.msra.mxu0 0.0
    %1022 = vmatprep.subr.mxu0 0.0
    %1023 = vmatpush2.msra.mxu0 0.0
    %1024 = vmatprep.subr.mxu0 0.0
    %1025 = vmatpush2.msra.mxu0 0.0
    %1026 = vmatprep.subr.mxu0 0.0
    %1027 = vmatpush2.msra.mxu0 0.0
    %1028 = vmatprep.subr.mxu0 0.0
    %1029 = vmatpush2.msra.mxu0 0.0
    %1030 = vmatprep.subr.mxu0 0.0
    %1031 = vmatpush2.msra.mxu0 0.0
    %1032 = vmatprep.subr.mxu0 0.0
    %1033 = vmatpush2.msra.mxu0 0.0
    %1034 = vmatprep.subr.mxu0 0.0
    %1035 = vmatpush2.msra.mxu0 0.0
    %1036 = vmatprep.subr.mxu0 0.0
    %1037 = vmatpush2.msra.mxu0 0.0
    %1038 = vmatprep.subr.mxu0 0.0
    %1039 = vmatpush2.msra.mxu0 0.0
    %1040 = vmatprep.subr.mxu0 0.0
    %1041 = vmatpush2.msra.mxu0 0.0
    %1042 = vmatprep.subr.mxu0 0.0
    %1043 = vmatpush2.msra.mxu0 0.0
    %1044 = vmatprep.subr.mxu0 0.0
    %1045 = vmatpush2.msra.mxu0 0.0
    %1046 = vmatprep.subr.mxu0 0.0
    %1047 = vmatpush2.msra.mxu0 0.0
    %1048 = vmatprep.mubr.f32.mxu0 0.0
    %1049 = vmatmul.mubr.f32.gmra.mxu0 %v982
    %v1050 = vpop.f32.mrf.mxu0
    %v1051 = vadd.f32 %v878, %v1050
    %v1052 = vpop.f32.mrf.mxu0
    %v1053 = vadd.f32 %v879, %v1052
    %1054 = vdwg.mxu0
    %v1055 = vxor.u32 %v1051, 2147483648
    %v1056 = vxor.u32 %v1053, 2147483648
    %v1057 = vmul.f32 %v1055, 1.442695
    %v1058 = vpow.pop %v1057
    %v1059 = vmul.f32 %v1056, 1.442695
    %v1060 = vpow.pop %v1059
    %v1061 = vadd.f32 %v1058, 1.0
    %v1062 = vadd.f32 %v1060, 1.0
    %v1063 = vrcp.pop %v1061
    %v1064 = vmul.f32 1.0, %v1063
    %v1065 = vrcp.pop %v1062
    %v1066 = vmul.f32 1.0, %v1065
    %v1067 = vmul.f32 %v1066, 2.0
    %v1068 = vsub.f32 %v1067, 1.0
    %v1069 = vmul.f32 %v1064, %v976
    %v1070 = vmul.f32 %v1064, %v1068
    %1072 = vrot.lane.b32.xlu0 %v1070, 64
    %v1073 = vpop.permute.xlu0 %1072
    %v1075 = vadd.f32 %v1069, %v1073
    %v1076 = vtanh.pop %v1075
    %v1077 = vmul.f32 %v1066, %v1076
    %v1078 = vld [vmem:[%s4] sm:$0x1]
    %v1080 = vlaneseq
    %v1081 = vshrl.u32 %v1080, 7
    %v1082 = vsub.s32 0, %v1081
    %v1083 = vrot.slane %v1078, %v1082
    %1084 = vrot.lane.b32.xlu0 %v1083, 96
    %v1085 = vpop.permute.xlu0 %1084
    %v1087 = vmul.f32 %v1077, %v1085
    %1089 = vrot.lane.b32.xlu0 %v1087, 32
    %v1090 = vpop.permute.xlu0 %1089
    %vm1092 = vcmask 261120
    %v1093 = vsel %vm1092, %v1090, 0.0
    %1094 = vadd.xlane.f32.xlu0 %v1093
    %v1095 = vpop.xlane.xlu0 %1094
    %v1096 = vld [vmem:[#allocation3] sm:$0x1]
    %v1098 = vlaneseq
    %v1099 = vshrl.u32 %v1098, 7
    %v1100 = vsub.s32 0, %v1099
    %v1101 = vrot.slane %v1096, %v1100
    %v1103 = vadd.f32 %v1095, %v1101
    %vm1104 = vcmask 7168
    %1105 = vst.msk [vmem:[%s6] sm:$0xff] %vm1104, %v1103
    // Predicated region
    $region30: #{tpu_custom_call.1} parent=1 // pred_check
      _
    $region31: #{tpu_custom_call.1} parent=1 // pred_check_branch
      %1107 = sbr.rel (0) target = $region33
    $region32: #{tpu_custom_call.1} parent=1 // pred_region
      _
    $region33: #{tpu_custom_call.1} parent=1 // pred_fallthru
      _
    // Predicated region
    $region34: #{tpu_custom_call.1} parent=1 // pred_check
      _
    $region35: #{tpu_custom_call.1} parent=1 // pred_check_branch
      %1109 = sbr.rel (0) target = $region37
    $region36: #{tpu_custom_call.1} parent=1 // pred_region
      _
    $region37: #{tpu_custom_call.1} parent=1 // pred_fallthru
      _
    %1110 = vsyncpa [#allocation5], 1

</llo_original>
